<compile_context>
chip_gen: v6e
topology: v6e:2x2x1
jax: 0.10.0
libtpu: 0.0.40
codegen_flags: <defaults>
</compile_context>

<pallas_src>
import functools

import jax
import jax.numpy as jnp
from jax.experimental import pallas as pl
from jax.experimental.pallas import tpu as pltpu


def _round_up(x, m):
    return ((x + m - 1) // m) * m


# ----------------------------------------------------------------------------
# Pallas kernel: fused (M,K)@(K,N) + bias + activation (the conv hot path)
# ----------------------------------------------------------------------------
def _matmul_bias_act_kernel(a_ref, b_ref, bias_ref, o_ref, *, act):
    acc = jnp.dot(a_ref[...], b_ref[...], preferred_element_type=jnp.float32)
    acc = acc + bias_ref[...]                 # (tm, N) + (1, N) broadcast, f32
    if act == "relu":
        acc = jnp.maximum(acc, 0.0)
    elif act == "tanh":
        acc = jnp.tanh(acc)
    o_ref[...] = acc.astype(o_ref.dtype)


def pallas_matmul_bias_act(a, b, bias, act, *, tm_max=256):
    """a: (M, K), b: (K, N), bias: (N,) -> f32 (M, N) with fused activation."""
    M, K = a.shape
    K2, N = b.shape
    assert K == K2
    a = a.astype(jnp.bfloat16)                # MXU-native operands
    b = b.astype(jnp.bfloat16)
    bias2d = bias.reshape(1, N).astype(jnp.float32)

    tm = min(tm_max, _round_up(M, 8))         # sublane-aligned row tile
    Mp = _round_up(M, tm)
    if Mp != M:
        a = jnp.pad(a, ((0, Mp - M), (0, 0)))

    out = pl.pallas_call(
        functools.partial(_matmul_bias_act_kernel, act=act),
        out_shape=jax.ShapeDtypeStruct((Mp, N), jnp.float32),
        grid=(Mp // tm,),
        in_specs=[
            pl.BlockSpec((tm, K), lambda i: (i, 0)),   # A tile, pipelined over M
            pl.BlockSpec((K, N), lambda i: (0, 0)),    # full weight matrix
            pl.BlockSpec((1, N), lambda i: (0, 0)),    # bias row
        ],
        out_specs=pl.BlockSpec((tm, N), lambda i: (i, 0)),
        compiler_params=pltpu.CompilerParams(
            dimension_semantics=("parallel",),         # megacore on v7x
        ),
    )(a, b, bias2d)
    return out[:M] if Mp != M else out


# ----------------------------------------------------------------------------
# Conv / ConvTranspose glue (NHWC, lane-dense im2col; matmul in Pallas)
# ----------------------------------------------------------------------------
def conv2d_s2p1_nhwc(x, wmat, bias, act):
    """PyTorch Conv2d(kernel=3, stride=2, padding=1) on NHWC. wmat: (9*IC, OC)."""
    B, H, W, C = x.shape
    OC = wmat.shape[1]
    k, s, p = 3, 2, 1
    Ho = (H + 2 * p - k) // s + 1
    Wo = (W + 2 * p - k) // s + 1
    xp = jnp.pad(x, ((0, 0), (p, p), (p, p), (0, 0)))
    patches = []
    for kh in range(k):
        for kw in range(k):
            patches.append(xp[:, kh:kh + s * Ho:s, kw:kw + s * Wo:s, :])
    col = jnp.concatenate(patches, axis=-1)            # (B,Ho,Wo,9*C), (kh,kw,ic)
    col = col.reshape(B * Ho * Wo, k * k * C)
    out = pallas_matmul_bias_act(col, wmat, bias, act)  # (B*Ho*Wo, OC)
    return out.reshape(B, Ho, Wo, OC)


def conv_transpose2d_s2p1op1_nhwc(x, wmat, bias4, act):
    """PyTorch ConvTranspose2d(k=3, s=2, p=1, output_padding=1) via sub-pixel
    phases. wmat: (4*IC, 4*OC), rows ordered (dy, dx, ic) over a 2x2 input
    window, cols ordered (py, px, oc) over the 4 output phases."""
    B, H, W, C = x.shape
    OC = wmat.shape[1] // 4
    xp = jnp.pad(x, ((0, 0), (0, 1), (0, 1), (0, 0)))   # bottom/right halo
    patches = []
    for dy in range(2):
        for dx in range(2):
            patches.append(xp[:, dy:dy + H, dx:dx + W, :])
    col = jnp.concatenate(patches, axis=-1).reshape(B * H * W, 4 * C)
    out = pallas_matmul_bias_act(col, wmat, bias4, act)  # (B*H*W, 4*OC)
    out = out.reshape(B, H, W, 2, 2, OC).transpose(0, 1, 3, 2, 4, 5)
    return out.reshape(B, 2 * H, 2 * W, OC)


# ----------------------------------------------------------------------------
# Parameters: raw PyTorch-layout init + one-time matmul-layout precompute
# ----------------------------------------------------------------------------
def init_params(key):
    def nrm(k, shape, scale=0.1):
        return scale * jax.random.normal(k, shape, jnp.float32)

    ks = jax.random.split(key, 12)
    return {
        # encoder Conv2d weights: (OC, IC, 3, 3)
        "w1": nrm(ks[0], (32, 1, 3, 3)),   "b1": nrm(ks[1], (32,)),
        "w2": nrm(ks[2], (64, 32, 3, 3)),  "b2": nrm(ks[3], (64,)),
        "w3": nrm(ks[4], (128, 64, 3, 3)), "b3": nrm(ks[5], (128,)),
        # decoder ConvTranspose2d weights: (IC, OC, 3, 3)
        "wt1": nrm(ks[6], (128, 64, 3, 3)), "bt1": nrm(ks[7], (64,)),
        "wt2": nrm(ks[8], (64, 32, 3, 3)),  "bt2": nrm(ks[9], (32,)),
        "wt3": nrm(ks[10], (32, 3, 3, 3)),  "bt3": nrm(ks[11], (3,)),
    }


def _conv_wmat(w):
    # (OC, IC, 3, 3) -> (9*IC, OC), rows ordered (kh, kw, ic) to match im2col.
    OC, IC = w.shape[0], w.shape[1]
    return jnp.transpose(w, (2, 3, 1, 0)).reshape(9 * IC, OC)


def _deconv_wmat(w):
    # (IC, OC, 3, 3) -> (4*IC, 4*OC) sub-pixel matrix.
    # out[2m+py, 2n+px, oc] = sum_{dy,dx,ic} x[m+dy, n+dx, ic] * w[ic,oc,kh,kw]
    # with kh = kmap[(py,dy)], kw = kmap[(px,dx)]  (missing taps are zero).
    IC, OC = w.shape[0], w.shape[1]
    kmap = {(0, 0): 1, (1, 0): 2, (1, 1): 0}
    wmat = jnp.zeros((4 * IC, 4 * OC), jnp.float32)
    for py in range(2):
        for px in range(2):
            for dy in range(2):
                for dx in range(2):
                    kh = kmap.get((py, dy))
                    kw = kmap.get((px, dx))
                    if kh is None or kw is None:
                        continue
                    r0 = (dy * 2 + dx) * IC
                    c0 = (py * 2 + px) * OC
                    wmat = wmat.at[r0:r0 + IC, c0:c0 + OC].set(w[:, :, kh, kw])
    return wmat


def prepare_params(raw):
    """Hoist all matmul-ready weight layouts / extended biases (done once)."""
    return {
        "wm1": _conv_wmat(raw["w1"]), "b1": raw["b1"],
        "wm2": _conv_wmat(raw["w2"]), "b2": raw["b2"],
        "wm3": _conv_wmat(raw["w3"]), "b3": raw["b3"],
        "wtm1": _deconv_wmat(raw["wt1"]), "bt1": jnp.tile(raw["bt1"], 4),
        "wtm2": _deconv_wmat(raw["wt2"]), "bt2": jnp.tile(raw["bt2"], 4),
        "wtm3": _deconv_wmat(raw["wt3"]), "bt3": jnp.tile(raw["bt3"], 4),
    }


# ----------------------------------------------------------------------------
# Forward pass (NCHW at the boundary, NHWC inside)
# ----------------------------------------------------------------------------
def image_inpainting_autoencoder_forward(params, x_nchw):
    x = jnp.transpose(x_nchw, (0, 2, 3, 1))                       # NCHW -> NHWC
    # encoder
    x = conv2d_s2p1_nhwc(x, params["wm1"], params["b1"], "relu")
    x = conv2d_s2p1_nhwc(x, params["wm2"], params["b2"], "relu")
    x = conv2d_s2p1_nhwc(x, params["wm3"], params["b3"], "relu")
    # decoder
    x = conv_transpose2d_s2p1op1_nhwc(x, params["wtm1"], params["bt1"], "relu")
    x = conv_transpose2d_s2p1op1_nhwc(x, params["wtm2"], params["bt2"], "relu")
    x = conv_transpose2d_s2p1op1_nhwc(x, params["wtm3"], params["bt3"], "tanh")
    return jnp.transpose(x, (0, 3, 1, 2))                         # NHWC -> NCHW


if __name__ == "__main__":
    key = jax.random.PRNGKey(0)
    kp, kx = jax.random.split(key)
    params = prepare_params(init_params(kp))
    # NCHW input, 1 channel as required by the first conv.
    x = jax.random.normal(kx, (2, 1, 16, 16), jnp.float32)

    fwd = jax.jit(image_inpainting_autoencoder_forward)
    y = jax.block_until_ready(fwd(params, x))

    assert y.shape == (2, 3, 16, 16), y.shape
    assert bool(jnp.all(jnp.isfinite(y)))
    assert bool(jnp.all(jnp.abs(y) <= 1.0))  # tanh output range
    print("KERNEL_OK")
</pallas_src>

<mosaic_0001>
module attributes {stable_mosaic.version = 11 : i64} {
  func.func @_matmul_bias_act_kernel(%arg0: i32, %arg1: memref<128x9xbf16, #tpu.memory_space<vmem>>, %arg2: memref<9x32xbf16, #tpu.memory_space<vmem>>, %arg3: memref<1x32xf32, #tpu.memory_space<vmem>>, %arg4: memref<128x32xf32, #tpu.memory_space<vmem>>) attributes {dimension_semantics = [#tpu.dimension_semantics<parallel>], iteration_bounds = array<i64: 1>, scalar_prefetch = 0 : i64, scratch_operands = 0 : i64, tpu.core_type = #tpu.core_type<tc>, window_params = [{transform_indices = @transform_0, window_bounds = array<i64: 128, 9>}, {pipeline_mode = #tpu.pipeline_mode<synchronous>, transform_indices = @transform_1, window_bounds = array<i64: 9, 32>}, {pipeline_mode = #tpu.pipeline_mode<synchronous>, transform_indices = @transform_2, window_bounds = array<i64: 1, 32>}, {transform_indices = @transform_3, window_bounds = array<i64: 128, 32>}]} {
    %c0 = arith.constant 0 : index
    %c0_0 = arith.constant 0 : index
    %0 = vector.load %arg1[%c0, %c0_0] : memref<128x9xbf16, #tpu.memory_space<vmem>>, vector<128x9xbf16>
    %c0_1 = arith.constant 0 : index
    %c0_2 = arith.constant 0 : index
    %1 = vector.load %arg2[%c0_1, %c0_2] : memref<9x32xbf16, #tpu.memory_space<vmem>>, vector<9x32xbf16>
    %cst = arith.constant dense<0.000000e+00> : vector<128x32xf32>
    %2 = tpu.matmul %0, %1, %cst {dimension_numbers = #tpu.dot_dimension_numbers<[1], [0], [0], [1], [0, 0, 1, 1], [], []>} : vector<128x9xbf16>, vector<9x32xbf16>, vector<128x32xf32> -> vector<128x32xf32>
    %c0_3 = arith.constant 0 : index
    %c0_4 = arith.constant 0 : index
    %3 = vector.load %arg3[%c0_3, %c0_4] : memref<1x32xf32, #tpu.memory_space<vmem>>, vector<1x32xf32>
    %4 = vector.broadcast %3 : vector<1x32xf32> to vector<128x32xf32>
    %5 = arith.addf %2, %4 : vector<128x32xf32>
    %cst_5 = arith.constant 0.000000e+00 : f32
    %6 = vector.broadcast %cst_5 : f32 to vector<128x32xf32>
    %7 = arith.maximumf %5, %6 : vector<128x32xf32>
    %c0_6 = arith.constant 0 : index
    %c0_7 = arith.constant 0 : index
    %8 = vector.load %arg4[%c0_6, %c0_7] : memref<128x32xf32, #tpu.memory_space<vmem>>, vector<128x32xf32>
    tpu.vector_store %arg4[%c0_6, %c0_7], %7 {strides = array<i32>} : memref<128x32xf32, #tpu.memory_space<vmem>>, vector<128x32xf32>,
    return
  }
  func.func @transform_0(%arg0: i32) -> (i32, i32) {
    %c0_i32 = arith.constant 0 : i32
    %c0_i32_0 = arith.constant 0 : i32
    return %arg0, %c0_i32 : i32, i32
  }
  func.func @transform_1(%arg0: i32) -> (i32, i32) {
    %c0_i32 = arith.constant 0 : i32
    %c0_i32_0 = arith.constant 0 : i32
    %c0_i32_1 = arith.constant 0 : i32
    return %c0_i32, %c0_i32_0 : i32, i32
  }
  func.func @transform_2(%arg0: i32) -> (i32, i32) {
    %c0_i32 = arith.constant 0 : i32
    %c0_i32_0 = arith.constant 0 : i32
    %c0_i32_1 = arith.constant 0 : i32
    return %c0_i32, %c0_i32_0 : i32, i32
  }
  func.func @transform_3(%arg0: i32) -> (i32, i32) {
    %c0_i32 = arith.constant 0 : i32
    %c0_i32_0 = arith.constant 0 : i32
    return %arg0, %c0_i32 : i32, i32
  }
}

module attributes {stable_mosaic.version = 11 : i64} {
  func.func @_matmul_bias_act_kernel(%arg0: i32, %arg1: memref<32x288xbf16, #tpu.memory_space<vmem>>, %arg2: memref<288x64xbf16, #tpu.memory_space<vmem>>, %arg3: memref<1x64xf32, #tpu.memory_space<vmem>>, %arg4: memref<32x64xf32, #tpu.memory_space<vmem>>) attributes {dimension_semantics = [#tpu.dimension_semantics<parallel>], iteration_bounds = array<i64: 1>, scalar_prefetch = 0 : i64, scratch_operands = 0 : i64, tpu.core_type = #tpu.core_type<tc>, window_params = [{transform_indices = @transform_0, window_bounds = array<i64: 32, 288>}, {pipeline_mode = #tpu.pipeline_mode<synchronous>, transform_indices = @transform_1, window_bounds = array<i64: 288, 64>}, {pipeline_mode = #tpu.pipeline_mode<synchronous>, transform_indices = @transform_2, window_bounds = array<i64: 1, 64>}, {transform_indices = @transform_3, window_bounds = array<i64: 32, 64>}]} {
    %c0 = arith.constant 0 : index
    %c0_0 = arith.constant 0 : index
    %0 = vector.load %arg1[%c0, %c0_0] : memref<32x288xbf16, #tpu.memory_space<vmem>>, vector<32x288xbf16>
    %c0_1 = arith.constant 0 : index
    %c0_2 = arith.constant 0 : index
    %1 = vector.load %arg2[%c0_1, %c0_2] : memref<288x64xbf16, #tpu.memory_space<vmem>>, vector<288x64xbf16>
    %cst = arith.constant dense<0.000000e+00> : vector<32x64xf32>
    %2 = tpu.matmul %0, %1, %cst {dimension_numbers = #tpu.dot_dimension_numbers<[1], [0], [0], [1], [0, 0, 1, 1], [], []>} : vector<32x288xbf16>, vector<288x64xbf16>, vector<32x64xf32> -> vector<32x64xf32>
    %c0_3 = arith.constant 0 : index
    %c0_4 = arith.constant 0 : index
    %3 = vector.load %arg3[%c0_3, %c0_4] : memref<1x64xf32, #tpu.memory_space<vmem>>, vector<1x64xf32>
    %4 = vector.broadcast %3 : vector<1x64xf32> to vector<32x64xf32>
    %5 = arith.addf %2, %4 : vector<32x64xf32>
    %cst_5 = arith.constant 0.000000e+00 : f32
    %6 = vector.broadcast %cst_5 : f32 to vector<32x64xf32>
    %7 = arith.maximumf %5, %6 : vector<32x64xf32>
    %c0_6 = arith.constant 0 : index
    %c0_7 = arith.constant 0 : index
    %8 = vector.load %arg4[%c0_6, %c0_7] : memref<32x64xf32, #tpu.memory_space<vmem>>, vector<32x64xf32>
    tpu.vector_store %arg4[%c0_6, %c0_7], %7 {strides = array<i32>} : memref<32x64xf32, #tpu.memory_space<vmem>>, vector<32x64xf32>,
    return
  }
  func.func @transform_0(%arg0: i32) -> (i32, i32) {
    %c0_i32 = arith.constant 0 : i32
    %c0_i32_0 = arith.constant 0 : i32
    return %arg0, %c0_i32 : i32, i32
  }
  func.func @transform_1(%arg0: i32) -> (i32, i32) {
    %c0_i32 = arith.constant 0 : i32
    %c0_i32_0 = arith.constant 0 : i32
    %c0_i32_1 = arith.constant 0 : i32
    return %c0_i32, %c0_i32_0 : i32, i32
  }
  func.func @transform_2(%arg0: i32) -> (i32, i32) {
    %c0_i32 = arith.constant 0 : i32
    %c0_i32_0 = arith.constant 0 : i32
    %c0_i32_1 = arith.constant 0 : i32
    return %c0_i32, %c0_i32_0 : i32, i32
  }
  func.func @transform_3(%arg0: i32) -> (i32, i32) {
    %c0_i32 = arith.constant 0 : i32
    %c0_i32_0 = arith.constant 0 : i32
    return %arg0, %c0_i32 : i32, i32
  }
}

module attributes {stable_mosaic.version = 11 : i64} {
  func.func @_matmul_bias_act_kernel(%arg0: i32, %arg1: memref<8x576xbf16, #tpu.memory_space<vmem>>, %arg2: memref<576x128xbf16, #tpu.memory_space<vmem>>, %arg3: memref<1x128xf32, #tpu.memory_space<vmem>>, %arg4: memref<8x128xf32, #tpu.memory_space<vmem>>) attributes {dimension_semantics = [#tpu.dimension_semantics<parallel>], iteration_bounds = array<i64: 1>, scalar_prefetch = 0 : i64, scratch_operands = 0 : i64, tpu.core_type = #tpu.core_type<tc>, window_params = [{transform_indices = @transform_0, window_bounds = array<i64: 8, 576>}, {pipeline_mode = #tpu.pipeline_mode<synchronous>, transform_indices = @transform_1, window_bounds = array<i64: 576, 128>}, {pipeline_mode = #tpu.pipeline_mode<synchronous>, transform_indices = @transform_2, window_bounds = array<i64: 1, 128>}, {transform_indices = @transform_3, window_bounds = array<i64: 8, 128>}]} {
    %c0 = arith.constant 0 : index
    %c0_0 = arith.constant 0 : index
    %0 = vector.load %arg1[%c0, %c0_0] : memref<8x576xbf16, #tpu.memory_space<vmem>>, vector<8x576xbf16>
    %c0_1 = arith.constant 0 : index
    %c0_2 = arith.constant 0 : index
    %1 = vector.load %arg2[%c0_1, %c0_2] : memref<576x128xbf16, #tpu.memory_space<vmem>>, vector<576x128xbf16>
    %cst = arith.constant dense<0.000000e+00> : vector<8x128xf32>
    %2 = tpu.matmul %0, %1, %cst {dimension_numbers = #tpu.dot_dimension_numbers<[1], [0], [0], [1], [0, 0, 1, 1], [], []>} : vector<8x576xbf16>, vector<576x128xbf16>, vector<8x128xf32> -> vector<8x128xf32>
    %c0_3 = arith.constant 0 : index
    %c0_4 = arith.constant 0 : index
    %3 = vector.load %arg3[%c0_3, %c0_4] : memref<1x128xf32, #tpu.memory_space<vmem>>, vector<1x128xf32>
    %4 = vector.broadcast %3 : vector<1x128xf32> to vector<8x128xf32>
    %5 = arith.addf %2, %4 : vector<8x128xf32>
    %cst_5 = arith.constant 0.000000e+00 : f32
    %6 = vector.broadcast %cst_5 : f32 to vector<8x128xf32>
    %7 = arith.maximumf %5, %6 : vector<8x128xf32>
    %c0_6 = arith.constant 0 : index
    %c0_7 = arith.constant 0 : index
    %8 = vector.load %arg4[%c0_6, %c0_7] : memref<8x128xf32, #tpu.memory_space<vmem>>, vector<8x128xf32>
    tpu.vector_store %arg4[%c0_6, %c0_7], %7 {strides = array<i32>} : memref<8x128xf32, #tpu.memory_space<vmem>>, vector<8x128xf32>,
    return
  }
  func.func @transform_0(%arg0: i32) -> (i32, i32) {
    %c0_i32 = arith.constant 0 : i32
    %c0_i32_0 = arith.constant 0 : i32
    return %arg0, %c0_i32 : i32, i32
  }
  func.func @transform_1(%arg0: i32) -> (i32, i32) {
    %c0_i32 = arith.constant 0 : i32
    %c0_i32_0 = arith.constant 0 : i32
    %c0_i32_1 = arith.constant 0 : i32
    return %c0_i32, %c0_i32_0 : i32, i32
  }
  func.func @transform_2(%arg0: i32) -> (i32, i32) {
    %c0_i32 = arith.constant 0 : i32
    %c0_i32_0 = arith.constant 0 : i32
    %c0_i32_1 = arith.constant 0 : i32
    return %c0_i32, %c0_i32_0 : i32, i32
  }
  func.func @transform_3(%arg0: i32) -> (i32, i32) {
    %c0_i32 = arith.constant 0 : i32
    %c0_i32_0 = arith.constant 0 : i32
    return %arg0, %c0_i32 : i32, i32
  }
}

module attributes {stable_mosaic.version = 11 : i64} {
  func.func @_matmul_bias_act_kernel(%arg0: i32, %arg1: memref<8x512xbf16, #tpu.memory_space<vmem>>, %arg2: memref<512x256xbf16, #tpu.memory_space<vmem>>, %arg3: memref<1x256xf32, #tpu.memory_space<vmem>>, %arg4: memref<8x256xf32, #tpu.memory_space<vmem>>) attributes {dimension_semantics = [#tpu.dimension_semantics<parallel>], iteration_bounds = array<i64: 1>, scalar_prefetch = 0 : i64, scratch_operands = 0 : i64, tpu.core_type = #tpu.core_type<tc>, window_params = [{transform_indices = @transform_0, window_bounds = array<i64: 8, 512>}, {pipeline_mode = #tpu.pipeline_mode<synchronous>, transform_indices = @transform_1, window_bounds = array<i64: 512, 256>}, {pipeline_mode = #tpu.pipeline_mode<synchronous>, transform_indices = @transform_2, window_bounds = array<i64: 1, 256>}, {transform_indices = @transform_3, window_bounds = array<i64: 8, 256>}]} {
    %c0 = arith.constant 0 : index
    %c0_0 = arith.constant 0 : index
    %0 = vector.load %arg1[%c0, %c0_0] : memref<8x512xbf16, #tpu.memory_space<vmem>>, vector<8x512xbf16>
    %c0_1 = arith.constant 0 : index
    %c0_2 = arith.constant 0 : index
    %1 = vector.load %arg2[%c0_1, %c0_2] : memref<512x256xbf16, #tpu.memory_space<vmem>>, vector<512x256xbf16>
    %cst = arith.constant dense<0.000000e+00> : vector<8x256xf32>
    %2 = tpu.matmul %0, %1, %cst {dimension_numbers = #tpu.dot_dimension_numbers<[1], [0], [0], [1], [0, 0, 1, 1], [], []>} : vector<8x512xbf16>, vector<512x256xbf16>, vector<8x256xf32> -> vector<8x256xf32>
    %c0_3 = arith.constant 0 : index
    %c0_4 = arith.constant 0 : index
    %3 = vector.load %arg3[%c0_3, %c0_4] : memref<1x256xf32, #tpu.memory_space<vmem>>, vector<1x256xf32>
    %4 = vector.broadcast %3 : vector<1x256xf32> to vector<8x256xf32>
    %5 = arith.addf %2, %4 : vector<8x256xf32>
    %cst_5 = arith.constant 0.000000e+00 : f32
    %6 = vector.broadcast %cst_5 : f32 to vector<8x256xf32>
    %7 = arith.maximumf %5, %6 : vector<8x256xf32>
    %c0_6 = arith.constant 0 : index
    %c0_7 = arith.constant 0 : index
    %8 = vector.load %arg4[%c0_6, %c0_7] : memref<8x256xf32, #tpu.memory_space<vmem>>, vector<8x256xf32>
    tpu.vector_store %arg4[%c0_6, %c0_7], %7 {strides = array<i32>} : memref<8x256xf32, #tpu.memory_space<vmem>>, vector<8x256xf32>,
    return
  }
  func.func @transform_0(%arg0: i32) -> (i32, i32) {
    %c0_i32 = arith.constant 0 : i32
    %c0_i32_0 = arith.constant 0 : i32
    return %arg0, %c0_i32 : i32, i32
  }
  func.func @transform_1(%arg0: i32) -> (i32, i32) {
    %c0_i32 = arith.constant 0 : i32
    %c0_i32_0 = arith.constant 0 : i32
    %c0_i32_1 = arith.constant 0 : i32
    return %c0_i32, %c0_i32_0 : i32, i32
  }
  func.func @transform_2(%arg0: i32) -> (i32, i32) {
    %c0_i32 = arith.constant 0 : i32
    %c0_i32_0 = arith.constant 0 : i32
    %c0_i32_1 = arith.constant 0 : i32
    return %c0_i32, %c0_i32_0 : i32, i32
  }
  func.func @transform_3(%arg0: i32) -> (i32, i32) {
    %c0_i32 = arith.constant 0 : i32
    %c0_i32_0 = arith.constant 0 : i32
    return %arg0, %c0_i32 : i32, i32
  }
}

module attributes {stable_mosaic.version = 11 : i64} {
  func.func @_matmul_bias_act_kernel(%arg0: i32, %arg1: memref<32x256xbf16, #tpu.memory_space<vmem>>, %arg2: memref<256x128xbf16, #tpu.memory_space<vmem>>, %arg3: memref<1x128xf32, #tpu.memory_space<vmem>>, %arg4: memref<32x128xf32, #tpu.memory_space<vmem>>) attributes {dimension_semantics = [#tpu.dimension_semantics<parallel>], iteration_bounds = array<i64: 1>, scalar_prefetch = 0 : i64, scratch_operands = 0 : i64, tpu.core_type = #tpu.core_type<tc>, window_params = [{transform_indices = @transform_0, window_bounds = array<i64: 32, 256>}, {pipeline_mode = #tpu.pipeline_mode<synchronous>, transform_indices = @transform_1, window_bounds = array<i64: 256, 128>}, {pipeline_mode = #tpu.pipeline_mode<synchronous>, transform_indices = @transform_2, window_bounds = array<i64: 1, 128>}, {transform_indices = @transform_3, window_bounds = array<i64: 32, 128>}]} {
    %c0 = arith.constant 0 : index
    %c0_0 = arith.constant 0 : index
    %0 = vector.load %arg1[%c0, %c0_0] : memref<32x256xbf16, #tpu.memory_space<vmem>>, vector<32x256xbf16>
    %c0_1 = arith.constant 0 : index
    %c0_2 = arith.constant 0 : index
    %1 = vector.load %arg2[%c0_1, %c0_2] : memref<256x128xbf16, #tpu.memory_space<vmem>>, vector<256x128xbf16>
    %cst = arith.constant dense<0.000000e+00> : vector<32x128xf32>
    %2 = tpu.matmul %0, %1, %cst {dimension_numbers = #tpu.dot_dimension_numbers<[1], [0], [0], [1], [0, 0, 1, 1], [], []>} : vector<32x256xbf16>, vector<256x128xbf16>, vector<32x128xf32> -> vector<32x128xf32>
    %c0_3 = arith.constant 0 : index
    %c0_4 = arith.constant 0 : index
    %3 = vector.load %arg3[%c0_3, %c0_4] : memref<1x128xf32, #tpu.memory_space<vmem>>, vector<1x128xf32>
    %4 = vector.broadcast %3 : vector<1x128xf32> to vector<32x128xf32>
    %5 = arith.addf %2, %4 : vector<32x128xf32>
    %cst_5 = arith.constant 0.000000e+00 : f32
    %6 = vector.broadcast %cst_5 : f32 to vector<32x128xf32>
    %7 = arith.maximumf %5, %6 : vector<32x128xf32>
    %c0_6 = arith.constant 0 : index
    %c0_7 = arith.constant 0 : index
    %8 = vector.load %arg4[%c0_6, %c0_7] : memref<32x128xf32, #tpu.memory_space<vmem>>, vector<32x128xf32>
    tpu.vector_store %arg4[%c0_6, %c0_7], %7 {strides = array<i32>} : memref<32x128xf32, #tpu.memory_space<vmem>>, vector<32x128xf32>,
    return
  }
  func.func @transform_0(%arg0: i32) -> (i32, i32) {
    %c0_i32 = arith.constant 0 : i32
    %c0_i32_0 = arith.constant 0 : i32
    return %arg0, %c0_i32 : i32, i32
  }
  func.func @transform_1(%arg0: i32) -> (i32, i32) {
    %c0_i32 = arith.constant 0 : i32
    %c0_i32_0 = arith.constant 0 : i32
    %c0_i32_1 = arith.constant 0 : i32
    return %c0_i32, %c0_i32_0 : i32, i32
  }
  func.func @transform_2(%arg0: i32) -> (i32, i32) {
    %c0_i32 = arith.constant 0 : i32
    %c0_i32_0 = arith.constant 0 : i32
    %c0_i32_1 = arith.constant 0 : i32
    return %c0_i32, %c0_i32_0 : i32, i32
  }
  func.func @transform_3(%arg0: i32) -> (i32, i32) {
    %c0_i32 = arith.constant 0 : i32
    %c0_i32_0 = arith.constant 0 : i32
    return %arg0, %c0_i32 : i32, i32
  }
}

module attributes {stable_mosaic.version = 11 : i64} {
  func.func @_matmul_bias_act_kernel(%arg0: i32, %arg1: memref<128x128xbf16, #tpu.memory_space<vmem>>, %arg2: memref<128x12xbf16, #tpu.memory_space<vmem>>, %arg3: memref<1x12xf32, #tpu.memory_space<vmem>>, %arg4: memref<128x12xf32, #tpu.memory_space<vmem>>) attributes {dimension_semantics = [#tpu.dimension_semantics<parallel>], iteration_bounds = array<i64: 1>, scalar_prefetch = 0 : i64, scratch_operands = 0 : i64, tpu.core_type = #tpu.core_type<tc>, window_params = [{transform_indices = @transform_0, window_bounds = array<i64: 128, 128>}, {pipeline_mode = #tpu.pipeline_mode<synchronous>, transform_indices = @transform_1, window_bounds = array<i64: 128, 12>}, {pipeline_mode = #tpu.pipeline_mode<synchronous>, transform_indices = @transform_2, window_bounds = array<i64: 1, 12>}, {transform_indices = @transform_3, window_bounds = array<i64: 128, 12>}]} {
    %c0 = arith.constant 0 : index
    %c0_0 = arith.constant 0 : index
    %0 = vector.load %arg1[%c0, %c0_0] : memref<128x128xbf16, #tpu.memory_space<vmem>>, vector<128x128xbf16>
    %c0_1 = arith.constant 0 : index
    %c0_2 = arith.constant 0 : index
    %1 = vector.load %arg2[%c0_1, %c0_2] : memref<128x12xbf16, #tpu.memory_space<vmem>>, vector<128x12xbf16>
    %cst = arith.constant dense<0.000000e+00> : vector<128x12xf32>
    %2 = tpu.matmul %0, %1, %cst {dimension_numbers = #tpu.dot_dimension_numbers<[1], [0], [0], [1], [0, 0, 1, 1], [], []>} : vector<128x128xbf16>, vector<128x12xbf16>, vector<128x12xf32> -> vector<128x12xf32>
    %c0_3 = arith.constant 0 : index
    %c0_4 = arith.constant 0 : index
    %3 = vector.load %arg3[%c0_3, %c0_4] : memref<1x12xf32, #tpu.memory_space<vmem>>, vector<1x12xf32>
    %4 = vector.broadcast %3 : vector<1x12xf32> to vector<128x12xf32>
    %5 = arith.addf %2, %4 : vector<128x12xf32>
    %6 = math.tanh %5 : vector<128x12xf32>
    %c0_5 = arith.constant 0 : index
    %c0_6 = arith.constant 0 : index
    %7 = vector.load %arg4[%c0_5, %c0_6] : memref<128x12xf32, #tpu.memory_space<vmem>>, vector<128x12xf32>
    tpu.vector_store %arg4[%c0_5, %c0_6], %6 {strides = array<i32>} : memref<128x12xf32, #tpu.memory_space<vmem>>, vector<128x12xf32>,
    return
  }
  func.func @transform_0(%arg0: i32) -> (i32, i32) {
    %c0_i32 = arith.constant 0 : i32
    %c0_i32_0 = arith.constant 0 : i32
    return %arg0, %c0_i32 : i32, i32
  }
  func.func @transform_1(%arg0: i32) -> (i32, i32) {
    %c0_i32 = arith.constant 0 : i32
    %c0_i32_0 = arith.constant 0 : i32
    %c0_i32_1 = arith.constant 0 : i32
    return %c0_i32, %c0_i32_0 : i32, i32
  }
  func.func @transform_2(%arg0: i32) -> (i32, i32) {
    %c0_i32 = arith.constant 0 : i32
    %c0_i32_0 = arith.constant 0 : i32
    %c0_i32_1 = arith.constant 0 : i32
    return %c0_i32, %c0_i32_0 : i32, i32
  }
  func.func @transform_3(%arg0: i32) -> (i32, i32) {
    %c0_i32 = arith.constant 0 : i32
    %c0_i32_0 = arith.constant 0 : i32
    return %arg0, %c0_i32 : i32, i32
  }
}

</mosaic_0001>

<llo_original>
// kernel: image_inpainting_autoencoder_forward.6
$region0: #{image_inpainting_autoencoder_forward.6}
  #allocation0 [shape = 'u32[]', space=smem, size = 0x4, offset = 0x4, fixed_abs, tag = 'smem constant byte address 0x4 - core index']
  #allocation1 [shape = 'u32[144,128]{1,0:T(1,128)}', space=vmem, size = 0x12000, scoped, tag = 'internal scratch']
  %s0 = inlined_call_operand.vmem [shape: bf16[128,9], index: 0, kind: input, shape index: {}]
  %s1 = inlined_call_operand.vmem [shape: bf16[9,32], index: 1, kind: input, shape index: {}]
  %s2 = inlined_call_operand.vmem [shape: f32[1,32], index: 2, kind: input, shape index: {}]
  %s3 = inlined_call_operand.vmem [shape: f32[128,32], index: 3, kind: output, shape index: {}]
  %s4 = sld [smem:[#allocation0]]
  $region22: #{image_inpainting_autoencoder_forward.6} parent=0
    _
  %s6 = ssub.s32 1, %s4
  %s7 = scalar_select 0, %s6, %s4
  // Predicated region
  $region2: #{image_inpainting_autoencoder_forward.6} parent=0 // pred_check
    _
  $region3: #{image_inpainting_autoencoder_forward.6} parent=0 // pred_check_branch
    %9 = sbr.rel (0) target = $region5
  $region4: #{image_inpainting_autoencoder_forward.6} parent=0 // pred_region
    _
  $region5: #{image_inpainting_autoencoder_forward.6} parent=0 // pred_fallthru
    _
  // Predicated region
  $region6: #{image_inpainting_autoencoder_forward.6} parent=0 // pred_check
    _
  $region7: #{image_inpainting_autoencoder_forward.6} parent=0 // pred_check_branch
    %11 = sbr.rel (0) target = $region9
  $region8: #{image_inpainting_autoencoder_forward.6} parent=0 // pred_region
    _
  $region9: #{image_inpainting_autoencoder_forward.6} parent=0 // pred_fallthru
    _
  // Predicated region
  $region10: #{image_inpainting_autoencoder_forward.6} parent=0 // pred_check
    _
  $region11: #{image_inpainting_autoencoder_forward.6} parent=0 // pred_check_branch
    %13 = sbr.rel (0) target = $region13
  $region12: #{image_inpainting_autoencoder_forward.6} parent=0 // pred_region
    _
  $region13: #{image_inpainting_autoencoder_forward.6} parent=0 // pred_fallthru
    _
  %v15 = vld [vmem:[%s0] sm:$0xf]
  %v16 = vld [vmem:[%s0 + $0x4] sm:$0xf]
  %v17 = vld [vmem:[%s0 + $0x8] sm:$0xf]
  %v18 = vld [vmem:[%s0 + $0xc] sm:$0xf]
  %v19 = vld [vmem:[%s0 + $0x10] sm:$0xf]
  %v20 = vld [vmem:[%s0 + $0x14] sm:$0xf]
  %v21 = vld [vmem:[%s0 + $0x18] sm:$0xf]
  %v22 = vld [vmem:[%s0 + $0x1c] sm:$0xf]
  %v23 = vld [vmem:[%s0 + $0x20] sm:$0xf]
  %v24 = vld [vmem:[%s0 + $0x24] sm:$0xf]
  %v25 = vld [vmem:[%s0 + $0x28] sm:$0xf]
  %v26 = vld [vmem:[%s0 + $0x2c] sm:$0xf]
  %v27 = vld [vmem:[%s0 + $0x30] sm:$0xf]
  %v28 = vld [vmem:[%s0 + $0x34] sm:$0xf]
  %v29 = vld [vmem:[%s0 + $0x38] sm:$0xf]
  %v30 = vld [vmem:[%s0 + $0x3c] sm:$0xf]
  %v31 = vld [vmem:[%s1] sm:$0xf]
  %v32 = vld [vmem:[%s1 + $0x4] sm:$0x1]
  %v33 = vld [vmem:[%s2] sm:$0x1]
  %v35 = vlaneseq
  %v36 = vshrl.u32 %v35, 7
  %v37 = vsub.s32 0, %v36
  %v38 = vrot.slane %v33, %v37
  %v56 = vunpack.c.l.b16 %v15
  %v57 = vunpack.c.l.b16 %v16
  %v58 = vunpack.c.l.b16 %v17
  %v59 = vunpack.c.l.b16 %v18
  %v60 = vunpack.c.l.b16 %v19
  %v61 = vunpack.c.l.b16 %v20
  %v62 = vunpack.c.l.b16 %v21
  %v63 = vunpack.c.l.b16 %v22
  %v64 = vunpack.c.l.b16 %v23
  %v65 = vunpack.c.l.b16 %v24
  %v66 = vunpack.c.l.b16 %v25
  %v67 = vunpack.c.l.b16 %v26
  %v68 = vunpack.c.l.b16 %v27
  %v69 = vunpack.c.l.b16 %v28
  %v70 = vunpack.c.l.b16 %v29
  %v71 = vunpack.c.l.b16 %v30
  %v72 = vpack.c.b16 %v57, %v56
  %v73 = vpack.c.b16 %v59, %v58
  %v74 = vpack.c.b16 %v61, %v60
  %v75 = vpack.c.b16 %v63, %v62
  %v76 = vpack.c.b16 %v65, %v64
  %v77 = vpack.c.b16 %v67, %v66
  %v78 = vpack.c.b16 %v69, %v68
  %v79 = vpack.c.b16 %v71, %v70
  %v82 = vunpack.c.l.b16 %v31
  %v83 = vunpack.c.l.b16 %v32
  %v84 = vpack.c.b16 %v83, %v82
  %vm85 = vcmask 72704
  %v87 = vsel %vm85, %v72, 0
  %v90 = vsel %vm85, %v73, 0
  %v93 = vsel %vm85, %v74, 0
  %v96 = vsel %vm85, %v75, 0
  %v99 = vsel %vm85, %v76, 0
  %v102 = vsel %vm85, %v77, 0
  %v105 = vsel %vm85, %v78, 0
  %v108 = vsel %vm85, %v79, 0
  %vm110 = vcmask 1043456
  %vm111 = vcmask 1044480
  %v112 = vsel %vm110, 4294967295, 65535
  %v113 = vsel %vm111, %v112, 0
  %v115 = vand.u32 %v84, %v113
  %117 = vmatprep.subr.bf16.mxu0 0
  %118 = vmatpush1.bf16.msra.mxu0 0
  %119 = vmatprep.subr.bf16.mxu0 0
  %120 = vmatpush1.bf16.msra.mxu0 0
  %121 = vmatprep.subr.bf16.mxu0 0
  %122 = vmatpush1.bf16.msra.mxu0 0
  %123 = vmatprep.subr.bf16.mxu0 0
  %124 = vmatpush1.bf16.msra.mxu0 0
  %125 = vmatprep.subr.bf16.mxu0 0
  %126 = vmatpush1.bf16.msra.mxu0 0
  %127 = vmatprep.subr.bf16.mxu0 0
  %128 = vmatpush1.bf16.msra.mxu0 0
  %129 = vmatprep.subr.bf16.mxu0 0
  %130 = vmatpush1.bf16.msra.mxu0 0
  %131 = vmatprep.subr.bf16.mxu0 0
  %132 = vmatpush1.bf16.msra.mxu0 %v115
  %133 = vmatprep.subr.bf16.mxu0 0
  %134 = vmatpush2.bf16.msra.mxu0 0
  %135 = vmatprep.subr.bf16.mxu0 0
  %136 = vmatpush2.bf16.msra.mxu0 0
  %137 = vmatprep.subr.bf16.mxu0 0
  %138 = vmatpush2.bf16.msra.mxu0 0
  %139 = vmatprep.subr.bf16.mxu0 0
  %140 = vmatpush2.bf16.msra.mxu0 0
  %141 = vmatprep.subr.bf16.mxu0 0
  %142 = vmatpush2.bf16.msra.mxu0 0
  %143 = vmatprep.subr.bf16.mxu0 0
  %144 = vmatpush2.bf16.msra.mxu0 0
  %145 = vmatprep.subr.bf16.mxu0 0
  %146 = vmatpush2.bf16.msra.mxu0 0
  %147 = vmatprep.subr.bf16.mxu0 0
  %148 = vmatpush2.bf16.msra.mxu0 0
  %149 = vmatprep.mubr.bf16.mxu0 0
  %150 = vmatmul.mubr.bf16.gmra.mxu0 %v87
  %v151 = vpop.f32.mrf.mxu0
  %v152 = vadd.f32 %v38, %v151
  %v153 = vpop.f32.mrf.mxu0
  %v154 = vpop.f32.mrf.mxu0
  %v155 = vadd.f32 %v38, %v154
  %v156 = vpop.f32.mrf.mxu0
  %157 = vmatprep.mubr.bf16.mxu0 0
  %158 = vmatmul.mubr.bf16.gmra.mxu0 %v90
  %v159 = vpop.f32.mrf.mxu0
  %v160 = vadd.f32 %v38, %v159
  %v161 = vpop.f32.mrf.mxu0
  %v162 = vpop.f32.mrf.mxu0
  %v163 = vadd.f32 %v38, %v162
  %v164 = vpop.f32.mrf.mxu0
  %165 = vmatprep.mubr.bf16.mxu0 0
  %166 = vmatmul.mubr.bf16.gmra.mxu0 %v93
  %v167 = vpop.f32.mrf.mxu0
  %v168 = vadd.f32 %v38, %v167
  %v169 = vpop.f32.mrf.mxu0
  %v170 = vpop.f32.mrf.mxu0
  %v171 = vadd.f32 %v38, %v170
  %v172 = vpop.f32.mrf.mxu0
  %173 = vmatprep.mubr.bf16.mxu0 0
  %174 = vmatmul.mubr.bf16.gmra.mxu0 %v96
  %v175 = vpop.f32.mrf.mxu0
  %v176 = vadd.f32 %v38, %v175
  %v177 = vpop.f32.mrf.mxu0
  %v178 = vpop.f32.mrf.mxu0
  %v179 = vadd.f32 %v38, %v178
  %v180 = vpop.f32.mrf.mxu0
  %181 = vmatprep.mubr.bf16.mxu0 0
  %182 = vmatmul.mubr.bf16.gmra.mxu0 %v99
  %v183 = vpop.f32.mrf.mxu0
  %v184 = vadd.f32 %v38, %v183
  %v185 = vpop.f32.mrf.mxu0
  %v186 = vpop.f32.mrf.mxu0
  %v187 = vadd.f32 %v38, %v186
  %v188 = vpop.f32.mrf.mxu0
  %189 = vmatprep.mubr.bf16.mxu0 0
  %190 = vmatmul.mubr.bf16.gmra.mxu0 %v102
  %v191 = vpop.f32.mrf.mxu0
  %v192 = vadd.f32 %v38, %v191
  %v193 = vpop.f32.mrf.mxu0
  %v194 = vpop.f32.mrf.mxu0
  %v195 = vadd.f32 %v38, %v194
  %v196 = vpop.f32.mrf.mxu0
  %197 = vmatprep.mubr.bf16.mxu0 0
  %198 = vmatmul.mubr.bf16.gmra.mxu0 %v105
  %v199 = vpop.f32.mrf.mxu0
  %v200 = vadd.f32 %v38, %v199
  %v201 = vpop.f32.mrf.mxu0
  %v202 = vpop.f32.mrf.mxu0
  %v203 = vadd.f32 %v38, %v202
  %v204 = vpop.f32.mrf.mxu0
  %205 = vmatprep.mubr.bf16.mxu0 0
  %206 = vmatmul.mubr.bf16.gmra.mxu0 %v108
  %v207 = vpop.f32.mrf.mxu0
  %v208 = vadd.f32 %v38, %v207
  %v209 = vpop.f32.mrf.mxu0
  %v210 = vpop.f32.mrf.mxu0
  %v211 = vadd.f32 %v38, %v210
  %v212 = vpop.f32.mrf.mxu0
  %213 = vdwg.mxu0
  %v214 = vmax.f32 %v152, 0.0
  %v215 = vmax.f32 %v155, 0.0
  %v216 = vmax.f32 %v160, 0.0
  %v217 = vmax.f32 %v163, 0.0
  %v218 = vmax.f32 %v168, 0.0
  %v219 = vmax.f32 %v171, 0.0
  %v220 = vmax.f32 %v176, 0.0
  %v221 = vmax.f32 %v179, 0.0
  %v222 = vmax.f32 %v184, 0.0
  %v223 = vmax.f32 %v187, 0.0
  %v224 = vmax.f32 %v192, 0.0
  %v225 = vmax.f32 %v195, 0.0
  %v226 = vmax.f32 %v200, 0.0
  %v227 = vmax.f32 %v203, 0.0
  %v228 = vmax.f32 %v208, 0.0
  %v229 = vmax.f32 %v211, 0.0
  %vm230 = vcmask 261120
  %231 = vst.msk [vmem:[%s3] sm:$0xff] %vm230, %v214
  %232 = vst.msk [vmem:[%s3 + $0x8] sm:$0xff] %vm230, %v215
  %233 = vst.msk [vmem:[%s3 + $0x10] sm:$0xff] %vm230, %v216
  %234 = vst.msk [vmem:[%s3 + $0x18] sm:$0xff] %vm230, %v217
  %235 = vst.msk [vmem:[%s3 + $0x20] sm:$0xff] %vm230, %v218
  %236 = vst.msk [vmem:[%s3 + $0x28] sm:$0xff] %vm230, %v219
  %237 = vst.msk [vmem:[%s3 + $0x30] sm:$0xff] %vm230, %v220
  %238 = vst.msk [vmem:[%s3 + $0x38] sm:$0xff] %vm230, %v221
  %239 = vst.msk [vmem:[%s3 + $0x40] sm:$0xff] %vm230, %v222
  %240 = vst.msk [vmem:[%s3 + $0x48] sm:$0xff] %vm230, %v223
  %241 = vst.msk [vmem:[%s3 + $0x50] sm:$0xff] %vm230, %v224
  %242 = vst.msk [vmem:[%s3 + $0x58] sm:$0xff] %vm230, %v225
  %243 = vst.msk [vmem:[%s3 + $0x60] sm:$0xff] %vm230, %v226
  %244 = vst.msk [vmem:[%s3 + $0x68] sm:$0xff] %vm230, %v227
  %245 = vst.msk [vmem:[%s3 + $0x70] sm:$0xff] %vm230, %v228
  %246 = vst.msk [vmem:[%s3 + $0x78] sm:$0xff] %vm230, %v229
  // Predicated region
  $region14: #{image_inpainting_autoencoder_forward.6} parent=0 // pred_check
    _
  $region15: #{image_inpainting_autoencoder_forward.6} parent=0 // pred_check_branch
    %248 = sbr.rel (0) target = $region17
  $region16: #{image_inpainting_autoencoder_forward.6} parent=0 // pred_region
    _
  $region17: #{image_inpainting_autoencoder_forward.6} parent=0 // pred_fallthru
    _
  // Predicated region
  $region18: #{image_inpainting_autoencoder_forward.6} parent=0 // pred_check
    _
  $region19: #{image_inpainting_autoencoder_forward.6} parent=0 // pred_check_branch
    %250 = sbr.rel (0) target = $region21
  $region20: #{image_inpainting_autoencoder_forward.6} parent=0 // pred_region
    _
  $region21: #{image_inpainting_autoencoder_forward.6} parent=0 // pred_fallthru
    _

// kernel: image_inpainting_autoencoder_forward.7
$region0: #{image_inpainting_autoencoder_forward.7}
  #allocation0 [shape = 'u32[]', space=smem, size = 0x4, offset = 0x4, fixed_abs, tag = 'smem constant byte address 0x4 - core index']
  #allocation1 [shape = 'u32[144,128]{1,0:T(1,128)}', space=vmem, size = 0x12000, scoped, tag = 'internal scratch']
  %s0 = inlined_call_operand.vmem [shape: bf16[32,288], index: 0, kind: input, shape index: {}]
  %s1 = inlined_call_operand.vmem [shape: bf16[288,64], index: 1, kind: input, shape index: {}]
  %s2 = inlined_call_operand.vmem [shape: f32[1,64], index: 2, kind: input, shape index: {}]
  %s3 = inlined_call_operand.vmem [shape: f32[32,64], index: 3, kind: output, shape index: {}]
  %s4 = sld [smem:[#allocation0]]
  $region22: #{image_inpainting_autoencoder_forward.7} parent=0
    _
  %s6 = ssub.s32 1, %s4
  %s7 = scalar_select 0, %s6, %s4
  // Predicated region
  $region2: #{image_inpainting_autoencoder_forward.7} parent=0 // pred_check
    _
  $region3: #{image_inpainting_autoencoder_forward.7} parent=0 // pred_check_branch
    %9 = sbr.rel (0) target = $region5
  $region4: #{image_inpainting_autoencoder_forward.7} parent=0 // pred_region
    _
  $region5: #{image_inpainting_autoencoder_forward.7} parent=0 // pred_fallthru
    _
  // Predicated region
  $region6: #{image_inpainting_autoencoder_forward.7} parent=0 // pred_check
    _
  $region7: #{image_inpainting_autoencoder_forward.7} parent=0 // pred_check_branch
    %11 = sbr.rel (0) target = $region9
  $region8: #{image_inpainting_autoencoder_forward.7} parent=0 // pred_region
    _
  $region9: #{image_inpainting_autoencoder_forward.7} parent=0 // pred_fallthru
    _
  // Predicated region
  $region10: #{image_inpainting_autoencoder_forward.7} parent=0 // pred_check
    _
  $region11: #{image_inpainting_autoencoder_forward.7} parent=0 // pred_check_branch
    %13 = sbr.rel (0) target = $region13
  $region12: #{image_inpainting_autoencoder_forward.7} parent=0 // pred_region
    _
  $region13: #{image_inpainting_autoencoder_forward.7} parent=0 // pred_fallthru
    _
  %v15 = vld [vmem:[%s0] sm:$0xff]
  %v16 = vld [vmem:[%s0 + $0x8] sm:$0xf]
  %v17 = vld [vmem:[%s0 + $0xc] sm:$0xff]
  %v18 = vld [vmem:[%s0 + $0x14] sm:$0xf]
  %v19 = vld [vmem:[%s0 + $0x18] sm:$0xff]
  %v20 = vld [vmem:[%s0 + $0x20] sm:$0xf]
  %v21 = vld [vmem:[%s0 + $0x24] sm:$0xff]
  %v22 = vld [vmem:[%s0 + $0x2c] sm:$0xf]
  %v23 = vld [vmem:[%s1] sm:$0xf]
  %v24 = vld [vmem:[%s1 + $0x4] sm:$0xf]
  %v25 = vld [vmem:[%s1 + $0x8] sm:$0xf]
  %v26 = vld [vmem:[%s1 + $0xc] sm:$0xf]
  %v27 = vld [vmem:[%s1 + $0x10] sm:$0xf]
  %v28 = vld [vmem:[%s1 + $0x14] sm:$0xf]
  %v29 = vld [vmem:[%s1 + $0x18] sm:$0xf]
  %v30 = vld [vmem:[%s1 + $0x1c] sm:$0xf]
  %v31 = vld [vmem:[%s1 + $0x20] sm:$0xf]
  %v32 = vld [vmem:[%s1 + $0x24] sm:$0xf]
  %v33 = vld [vmem:[%s1 + $0x28] sm:$0xf]
  %v34 = vld [vmem:[%s1 + $0x2c] sm:$0xf]
  %v35 = vld [vmem:[%s1 + $0x30] sm:$0xf]
  %v36 = vld [vmem:[%s1 + $0x34] sm:$0xf]
  %v37 = vld [vmem:[%s1 + $0x38] sm:$0xf]
  %v38 = vld [vmem:[%s1 + $0x3c] sm:$0xf]
  %v39 = vld [vmem:[%s1 + $0x40] sm:$0xf]
  %v40 = vld [vmem:[%s1 + $0x44] sm:$0xf]
  %v41 = vld [vmem:[%s1 + $0x48] sm:$0xf]
  %v42 = vld [vmem:[%s1 + $0x4c] sm:$0xf]
  %v43 = vld [vmem:[%s1 + $0x50] sm:$0xf]
  %v44 = vld [vmem:[%s1 + $0x54] sm:$0xf]
  %v45 = vld [vmem:[%s1 + $0x58] sm:$0xf]
  %v46 = vld [vmem:[%s1 + $0x5c] sm:$0xf]
  %v47 = vld [vmem:[%s1 + $0x60] sm:$0xf]
  %v48 = vld [vmem:[%s1 + $0x64] sm:$0xf]
  %v49 = vld [vmem:[%s1 + $0x68] sm:$0xf]
  %v50 = vld [vmem:[%s1 + $0x6c] sm:$0xf]
  %v51 = vld [vmem:[%s1 + $0x70] sm:$0xf]
  %v52 = vld [vmem:[%s1 + $0x74] sm:$0xf]
  %v53 = vld [vmem:[%s1 + $0x78] sm:$0xf]
  %v54 = vld [vmem:[%s1 + $0x7c] sm:$0xf]
  %v55 = vld [vmem:[%s1 + $0x80] sm:$0xf]
  %v56 = vld [vmem:[%s1 + $0x84] sm:$0xf]
  %v57 = vld [vmem:[%s1 + $0x88] sm:$0xf]
  %v58 = vld [vmem:[%s1 + $0x8c] sm:$0xf]
  %v59 = vld [vmem:[%s2] sm:$0x1]
  %v61 = vlaneseq
  %v62 = vshrl.u32 %v61, 7
  %v63 = vsub.s32 0, %v62
  %v64 = vrot.slane %v59, %v63
  %v74 = vunpack.c.l.b16 %v15
  %v75 = vunpack.c.h.b16 %v15
  %v76 = vunpack.c.l.b16 %v16
  %v77 = vunpack.c.l.b16 %v17
  %v78 = vunpack.c.h.b16 %v17
  %v79 = vunpack.c.l.b16 %v18
  %v80 = vunpack.c.l.b16 %v19
  %v81 = vunpack.c.h.b16 %v19
  %v82 = vunpack.c.l.b16 %v20
  %v83 = vunpack.c.l.b16 %v21
  %v84 = vunpack.c.h.b16 %v21
  %v85 = vunpack.c.l.b16 %v22
  %v86 = vpack.c.b16 %v77, %v74
  %v87 = vpack.c.b16 %v78, %v75
  %v88 = vpack.c.b16 %v79, %v76
  %v89 = vpack.c.b16 %v83, %v80
  %v90 = vpack.c.b16 %v84, %v81
  %v91 = vpack.c.b16 %v85, %v82
  %v132 = vunpack.c.l.b16 %v23
  %v133 = vunpack.c.l.b16 %v24
  %v134 = vunpack.c.l.b16 %v25
  %v135 = vunpack.c.l.b16 %v26
  %v136 = vunpack.c.l.b16 %v27
  %v137 = vunpack.c.l.b16 %v28
  %v138 = vunpack.c.l.b16 %v29
  %v139 = vunpack.c.l.b16 %v30
  %v140 = vunpack.c.l.b16 %v31
  %v141 = vunpack.c.l.b16 %v32
  %v142 = vunpack.c.l.b16 %v33
  %v143 = vunpack.c.l.b16 %v34
  %v144 = vunpack.c.l.b16 %v35
  %v145 = vunpack.c.l.b16 %v36
  %v146 = vunpack.c.l.b16 %v37
  %v147 = vunpack.c.l.b16 %v38
  %v148 = vunpack.c.l.b16 %v39
  %v149 = vunpack.c.l.b16 %v40
  %v150 = vunpack.c.l.b16 %v41
  %v151 = vunpack.c.l.b16 %v42
  %v152 = vunpack.c.l.b16 %v43
  %v153 = vunpack.c.l.b16 %v44
  %v154 = vunpack.c.l.b16 %v45
  %v155 = vunpack.c.l.b16 %v46
  %v156 = vunpack.c.l.b16 %v47
  %v157 = vunpack.c.l.b16 %v48
  %v158 = vunpack.c.l.b16 %v49
  %v159 = vunpack.c.l.b16 %v50
  %v160 = vunpack.c.l.b16 %v51
  %v161 = vunpack.c.l.b16 %v52
  %v162 = vunpack.c.l.b16 %v53
  %v163 = vunpack.c.l.b16 %v54
  %v164 = vunpack.c.l.b16 %v55
  %v165 = vunpack.c.l.b16 %v56
  %v166 = vunpack.c.l.b16 %v57
  %v167 = vunpack.c.l.b16 %v58
  %v168 = vpack.c.b16 %v133, %v132
  %v169 = vpack.c.b16 %v135, %v134
  %v170 = vpack.c.b16 %v137, %v136
  %v171 = vpack.c.b16 %v139, %v138
  %v172 = vpack.c.b16 %v141, %v140
  %v173 = vpack.c.b16 %v143, %v142
  %v174 = vpack.c.b16 %v145, %v144
  %v175 = vpack.c.b16 %v147, %v146
  %v176 = vpack.c.b16 %v149, %v148
  %v177 = vpack.c.b16 %v151, %v150
  %v178 = vpack.c.b16 %v153, %v152
  %v179 = vpack.c.b16 %v155, %v154
  %v180 = vpack.c.b16 %v157, %v156
  %v181 = vpack.c.b16 %v159, %v158
  %v182 = vpack.c.b16 %v161, %v160
  %v183 = vpack.c.b16 %v163, %v162
  %v184 = vpack.c.b16 %v165, %v164
  %v185 = vpack.c.b16 %v167, %v166
  %vm204 = vcmask 261120
  %v206 = vsel %vm204, %v88, 0
  %v209 = vsel %vm204, %v91, 0
  %211 = vmatprep.subr.bf16.mxu0 0
  %212 = vmatpush1.bf16.msra.mxu0 %v175
  %213 = vmatprep.subr.bf16.mxu0 0
  %214 = vmatpush1.bf16.msra.mxu0 %v174
  %215 = vmatprep.subr.bf16.mxu0 0
  %216 = vmatpush1.bf16.msra.mxu0 %v173
  %217 = vmatprep.subr.bf16.mxu0 0
  %218 = vmatpush1.bf16.msra.mxu0 %v172
  %219 = vmatprep.subr.bf16.mxu0 0
  %220 = vmatpush1.bf16.msra.mxu0 %v171
  %221 = vmatprep.subr.bf16.mxu0 0
  %222 = vmatpush1.bf16.msra.mxu0 %v170
  %223 = vmatprep.subr.bf16.mxu0 0
  %224 = vmatpush1.bf16.msra.mxu0 %v169
  %225 = vmatprep.subr.bf16.mxu0 0
  %226 = vmatpush1.bf16.msra.mxu0 %v168
  %227 = vmatprep.subr.bf16.mxu0 0
  %228 = vmatpush2.bf16.msra.mxu0 %v183
  %229 = vmatprep.subr.bf16.mxu0 0
  %230 = vmatpush2.bf16.msra.mxu0 %v182
  %231 = vmatprep.subr.bf16.mxu0 0
  %232 = vmatpush2.bf16.msra.mxu0 %v181
  %233 = vmatprep.subr.bf16.mxu0 0
  %234 = vmatpush2.bf16.msra.mxu0 %v180
  %235 = vmatprep.subr.bf16.mxu0 0
  %236 = vmatpush2.bf16.msra.mxu0 %v179
  %237 = vmatprep.subr.bf16.mxu0 0
  %238 = vmatpush2.bf16.msra.mxu0 %v178
  %239 = vmatprep.subr.bf16.mxu0 0
  %240 = vmatpush2.bf16.msra.mxu0 %v177
  %241 = vmatprep.subr.bf16.mxu0 0
  %242 = vmatpush2.bf16.msra.mxu0 %v176
  %243 = vmatprep.mubr.bf16.mxu0 %v87
  %244 = vmatmul.mubr.bf16.gmra.mxu0 %v86
  %v245 = vpop.f32.mrf.mxu0
  %v246 = vadd.f32 %v64, %v245
  %v247 = vpop.f32.mrf.mxu0
  %v248 = vpop.f32.mrf.mxu0
  %v249 = vadd.f32 %v64, %v248
  %v250 = vpop.f32.mrf.mxu0
  %251 = vmatprep.mubr.bf16.mxu0 %v90
  %252 = vmatmul.mubr.bf16.gmra.mxu0 %v89
  %v253 = vpop.f32.mrf.mxu0
  %v254 = vadd.f32 %v64, %v253
  %v255 = vpop.f32.mrf.mxu0
  %v256 = vpop.f32.mrf.mxu0
  %v257 = vadd.f32 %v64, %v256
  %v258 = vpop.f32.mrf.mxu0
  %259 = vdwg.mxu0
  %260 = vmatprep.subr.bf16.mxu0 0
  %261 = vmatpush1.bf16.msra.mxu0 0
  %262 = vmatprep.subr.bf16.mxu0 0
  %263 = vmatpush1.bf16.msra.mxu0 0
  %264 = vmatprep.subr.bf16.mxu0 0
  %265 = vmatpush1.bf16.msra.mxu0 0
  %266 = vmatprep.subr.bf16.mxu0 0
  %267 = vmatpush1.bf16.msra.mxu0 0
  %268 = vmatprep.subr.bf16.mxu0 0
  %269 = vmatpush1.bf16.msra.mxu0 0
  %270 = vmatprep.subr.bf16.mxu0 0
  %271 = vmatpush1.bf16.msra.mxu0 0
  %272 = vmatprep.subr.bf16.mxu0 0
  %273 = vmatpush1.bf16.msra.mxu0 %v185
  %274 = vmatprep.subr.bf16.mxu0 0
  %275 = vmatpush1.bf16.msra.mxu0 %v184
  %276 = vmatprep.subr.bf16.mxu0 0
  %277 = vmatpush2.bf16.msra.mxu0 0
  %278 = vmatprep.subr.bf16.mxu0 0
  %279 = vmatpush2.bf16.msra.mxu0 0
  %280 = vmatprep.subr.bf16.mxu0 0
  %281 = vmatpush2.bf16.msra.mxu0 0
  %282 = vmatprep.subr.bf16.mxu0 0
  %283 = vmatpush2.bf16.msra.mxu0 0
  %284 = vmatprep.subr.bf16.mxu0 0
  %285 = vmatpush2.bf16.msra.mxu0 0
  %286 = vmatprep.subr.bf16.mxu0 0
  %287 = vmatpush2.bf16.msra.mxu0 0
  %288 = vmatprep.subr.bf16.mxu0 0
  %289 = vmatpush2.bf16.msra.mxu0 0
  %290 = vmatprep.subr.bf16.mxu0 0
  %291 = vmatpush2.bf16.msra.mxu0 0
  %292 = vmatprep.mubr.bf16.mxu0 0
  %293 = vmatmul.mubr.bf16.gmra.mxu0 %v206
  %v294 = vpop.f32.mrf.mxu0
  %v295 = vadd.f32 %v246, %v294
  %v296 = vpop.f32.mrf.mxu0
  %v297 = vpop.f32.mrf.mxu0
  %v298 = vadd.f32 %v249, %v297
  %v299 = vpop.f32.mrf.mxu0
  %300 = vmatprep.mubr.bf16.mxu0 0
  %301 = vmatmul.mubr.bf16.gmra.mxu0 %v209
  %v302 = vpop.f32.mrf.mxu0
  %v303 = vadd.f32 %v254, %v302
  %v304 = vpop.f32.mrf.mxu0
  %v305 = vpop.f32.mrf.mxu0
  %v306 = vadd.f32 %v257, %v305
  %v307 = vpop.f32.mrf.mxu0
  %308 = vdwg.mxu0
  %v309 = vmax.f32 %v295, 0.0
  %v310 = vmax.f32 %v298, 0.0
  %v311 = vmax.f32 %v303, 0.0
  %v312 = vmax.f32 %v306, 0.0
  %vm313 = vcmask 523264
  %314 = vst.msk [vmem:[%s3] sm:$0xff] %vm313, %v309
  %315 = vst.msk [vmem:[%s3 + $0x8] sm:$0xff] %vm313, %v310
  %316 = vst.msk [vmem:[%s3 + $0x10] sm:$0xff] %vm313, %v311
  %317 = vst.msk [vmem:[%s3 + $0x18] sm:$0xff] %vm313, %v312
  // Predicated region
  $region14: #{image_inpainting_autoencoder_forward.7} parent=0 // pred_check
    _
  $region15: #{image_inpainting_autoencoder_forward.7} parent=0 // pred_check_branch
    %319 = sbr.rel (0) target = $region17
  $region16: #{image_inpainting_autoencoder_forward.7} parent=0 // pred_region
    _
  $region17: #{image_inpainting_autoencoder_forward.7} parent=0 // pred_fallthru
    _
  // Predicated region
  $region18: #{image_inpainting_autoencoder_forward.7} parent=0 // pred_check
    _
  $region19: #{image_inpainting_autoencoder_forward.7} parent=0 // pred_check_branch
    %321 = sbr.rel (0) target = $region21
  $region20: #{image_inpainting_autoencoder_forward.7} parent=0 // pred_region
    _
  $region21: #{image_inpainting_autoencoder_forward.7} parent=0 // pred_fallthru
    _

// kernel: image_inpainting_autoencoder_forward.8
$region0: #{image_inpainting_autoencoder_forward.8}
  #allocation0 [shape = 'u32[]', space=smem, size = 0x4, offset = 0x4, fixed_abs, tag = 'smem constant byte address 0x4 - core index']
  #allocation1 [shape = 'u32[144,128]{1,0:T(1,128)}', space=vmem, size = 0x12000, scoped, tag = 'internal scratch']
  %s0 = inlined_call_operand.vmem [shape: bf16[8,576], index: 0, kind: input, shape index: {}]
  %s1 = inlined_call_operand.vmem [shape: bf16[576,128], index: 1, kind: input, shape index: {}]
  %s2 = inlined_call_operand.vmem [shape: f32[1,128], index: 2, kind: input, shape index: {}]
  %s3 = inlined_call_operand.vmem [shape: f32[8,128], index: 3, kind: output, shape index: {}]
  %s4 = sld [smem:[#allocation0]]
  $region22: #{image_inpainting_autoencoder_forward.8} parent=0
    _
  %s6 = ssub.s32 1, %s4
  %s7 = scalar_select 0, %s6, %s4
  // Predicated region
  $region2: #{image_inpainting_autoencoder_forward.8} parent=0 // pred_check
    _
  $region3: #{image_inpainting_autoencoder_forward.8} parent=0 // pred_check_branch
    %9 = sbr.rel (0) target = $region5
  $region4: #{image_inpainting_autoencoder_forward.8} parent=0 // pred_region
    _
  $region5: #{image_inpainting_autoencoder_forward.8} parent=0 // pred_fallthru
    _
  // Predicated region
  $region6: #{image_inpainting_autoencoder_forward.8} parent=0 // pred_check
    _
  $region7: #{image_inpainting_autoencoder_forward.8} parent=0 // pred_check_branch
    %11 = sbr.rel (0) target = $region9
  $region8: #{image_inpainting_autoencoder_forward.8} parent=0 // pred_region
    _
  $region9: #{image_inpainting_autoencoder_forward.8} parent=0 // pred_fallthru
    _
  // Predicated region
  $region10: #{image_inpainting_autoencoder_forward.8} parent=0 // pred_check
    _
  $region11: #{image_inpainting_autoencoder_forward.8} parent=0 // pred_check_branch
    %13 = sbr.rel (0) target = $region13
  $region12: #{image_inpainting_autoencoder_forward.8} parent=0 // pred_region
    _
  $region13: #{image_inpainting_autoencoder_forward.8} parent=0 // pred_fallthru
    _
  %v15 = vld [vmem:[%s0] sm:$0xff]
  %v16 = vld [vmem:[%s0 + $0x8] sm:$0xff]
  %v17 = vld [vmem:[%s0 + $0x10] sm:$0xf]
  %v18 = vld [vmem:[%s1] sm:$0xf]
  %v19 = vld [vmem:[%s1 + $0x4] sm:$0xf]
  %v20 = vld [vmem:[%s1 + $0x8] sm:$0xf]
  %v21 = vld [vmem:[%s1 + $0xc] sm:$0xf]
  %v22 = vld [vmem:[%s1 + $0x10] sm:$0xf]
  %v23 = vld [vmem:[%s1 + $0x14] sm:$0xf]
  %v24 = vld [vmem:[%s1 + $0x18] sm:$0xf]
  %v25 = vld [vmem:[%s1 + $0x1c] sm:$0xf]
  %v26 = vld [vmem:[%s1 + $0x20] sm:$0xf]
  %v27 = vld [vmem:[%s1 + $0x24] sm:$0xf]
  %v28 = vld [vmem:[%s1 + $0x28] sm:$0xf]
  %v29 = vld [vmem:[%s1 + $0x2c] sm:$0xf]
  %v30 = vld [vmem:[%s1 + $0x30] sm:$0xf]
  %v31 = vld [vmem:[%s1 + $0x34] sm:$0xf]
  %v32 = vld [vmem:[%s1 + $0x38] sm:$0xf]
  %v33 = vld [vmem:[%s1 + $0x3c] sm:$0xf]
  %v34 = vld [vmem:[%s1 + $0x40] sm:$0xf]
  %v35 = vld [vmem:[%s1 + $0x44] sm:$0xf]
  %v36 = vld [vmem:[%s1 + $0x48] sm:$0xf]
  %v37 = vld [vmem:[%s1 + $0x4c] sm:$0xf]
  %v38 = vld [vmem:[%s1 + $0x50] sm:$0xf]
  %v39 = vld [vmem:[%s1 + $0x54] sm:$0xf]
  %v40 = vld [vmem:[%s1 + $0x58] sm:$0xf]
  %v41 = vld [vmem:[%s1 + $0x5c] sm:$0xf]
  %v42 = vld [vmem:[%s1 + $0x60] sm:$0xf]
  %v43 = vld [vmem:[%s1 + $0x64] sm:$0xf]
  %v44 = vld [vmem:[%s1 + $0x68] sm:$0xf]
  %v45 = vld [vmem:[%s1 + $0x6c] sm:$0xf]
  %v46 = vld [vmem:[%s1 + $0x70] sm:$0xf]
  %v47 = vld [vmem:[%s1 + $0x74] sm:$0xf]
  %v48 = vld [vmem:[%s1 + $0x78] sm:$0xf]
  %v49 = vld [vmem:[%s1 + $0x7c] sm:$0xf]
  %v50 = vld [vmem:[%s1 + $0x80] sm:$0xf]
  %v51 = vld [vmem:[%s1 + $0x84] sm:$0xf]
  %v52 = vld [vmem:[%s1 + $0x88] sm:$0xf]
  %v53 = vld [vmem:[%s1 + $0x8c] sm:$0xf]
  %v54 = vld [vmem:[%s1 + $0x90] sm:$0xf]
  %v55 = vld [vmem:[%s1 + $0x94] sm:$0xf]
  %v56 = vld [vmem:[%s1 + $0x98] sm:$0xf]
  %v57 = vld [vmem:[%s1 + $0x9c] sm:$0xf]
  %v58 = vld [vmem:[%s1 + $0xa0] sm:$0xf]
  %v59 = vld [vmem:[%s1 + $0xa4] sm:$0xf]
  %v60 = vld [vmem:[%s1 + $0xa8] sm:$0xf]
  %v61 = vld [vmem:[%s1 + $0xac] sm:$0xf]
  %v62 = vld [vmem:[%s1 + $0xb0] sm:$0xf]
  %v63 = vld [vmem:[%s1 + $0xb4] sm:$0xf]
  %v64 = vld [vmem:[%s1 + $0xb8] sm:$0xf]
  %v65 = vld [vmem:[%s1 + $0xbc] sm:$0xf]
  %v66 = vld [vmem:[%s1 + $0xc0] sm:$0xf]
  %v67 = vld [vmem:[%s1 + $0xc4] sm:$0xf]
  %v68 = vld [vmem:[%s1 + $0xc8] sm:$0xf]
  %v69 = vld [vmem:[%s1 + $0xcc] sm:$0xf]
  %v70 = vld [vmem:[%s1 + $0xd0] sm:$0xf]
  %v71 = vld [vmem:[%s1 + $0xd4] sm:$0xf]
  %v72 = vld [vmem:[%s1 + $0xd8] sm:$0xf]
  %v73 = vld [vmem:[%s1 + $0xdc] sm:$0xf]
  %v74 = vld [vmem:[%s1 + $0xe0] sm:$0xf]
  %v75 = vld [vmem:[%s1 + $0xe4] sm:$0xf]
  %v76 = vld [vmem:[%s1 + $0xe8] sm:$0xf]
  %v77 = vld [vmem:[%s1 + $0xec] sm:$0xf]
  %v78 = vld [vmem:[%s1 + $0xf0] sm:$0xf]
  %v79 = vld [vmem:[%s1 + $0xf4] sm:$0xf]
  %v80 = vld [vmem:[%s1 + $0xf8] sm:$0xf]
  %v81 = vld [vmem:[%s1 + $0xfc] sm:$0xf]
  %v82 = vld [vmem:[%s1 + $0x100] sm:$0xf]
  %v83 = vld [vmem:[%s1 + $0x104] sm:$0xf]
  %v84 = vld [vmem:[%s1 + $0x108] sm:$0xf]
  %v85 = vld [vmem:[%s1 + $0x10c] sm:$0xf]
  %v86 = vld [vmem:[%s1 + $0x110] sm:$0xf]
  %v87 = vld [vmem:[%s1 + $0x114] sm:$0xf]
  %v88 = vld [vmem:[%s1 + $0x118] sm:$0xf]
  %v89 = vld [vmem:[%s1 + $0x11c] sm:$0xf]
  %v90 = vld [vmem:[%s2] sm:$0x1]
  %v92 = vlaneseq
  %v93 = vshrl.u32 %v92, 7
  %v94 = vsub.s32 0, %v93
  %v95 = vrot.slane %v90, %v94
  %v100 = vunpack.c.l.b16 %v15
  %v101 = vunpack.c.h.b16 %v15
  %v102 = vunpack.c.l.b16 %v16
  %v103 = vunpack.c.h.b16 %v16
  %v104 = vunpack.c.l.b16 %v17
  %v105 = vpack.c.b16 %v100, %v100
  %v106 = vpack.c.b16 %v101, %v101
  %v107 = vpack.c.b16 %v102, %v102
  %v108 = vpack.c.b16 %v103, %v103
  %v109 = vpack.c.b16 %v104, %v104
  %v186 = vunpack.c.l.b16 %v18
  %v187 = vunpack.c.l.b16 %v19
  %v188 = vunpack.c.l.b16 %v20
  %v189 = vunpack.c.l.b16 %v21
  %v190 = vunpack.c.l.b16 %v22
  %v191 = vunpack.c.l.b16 %v23
  %v192 = vunpack.c.l.b16 %v24
  %v193 = vunpack.c.l.b16 %v25
  %v194 = vunpack.c.l.b16 %v26
  %v195 = vunpack.c.l.b16 %v27
  %v196 = vunpack.c.l.b16 %v28
  %v197 = vunpack.c.l.b16 %v29
  %v198 = vunpack.c.l.b16 %v30
  %v199 = vunpack.c.l.b16 %v31
  %v200 = vunpack.c.l.b16 %v32
  %v201 = vunpack.c.l.b16 %v33
  %v202 = vunpack.c.l.b16 %v34
  %v203 = vunpack.c.l.b16 %v35
  %v204 = vunpack.c.l.b16 %v36
  %v205 = vunpack.c.l.b16 %v37
  %v206 = vunpack.c.l.b16 %v38
  %v207 = vunpack.c.l.b16 %v39
  %v208 = vunpack.c.l.b16 %v40
  %v209 = vunpack.c.l.b16 %v41
  %v210 = vunpack.c.l.b16 %v42
  %v211 = vunpack.c.l.b16 %v43
  %v212 = vunpack.c.l.b16 %v44
  %v213 = vunpack.c.l.b16 %v45
  %v214 = vunpack.c.l.b16 %v46
  %v215 = vunpack.c.l.b16 %v47
  %v216 = vunpack.c.l.b16 %v48
  %v217 = vunpack.c.l.b16 %v49
  %v218 = vunpack.c.l.b16 %v50
  %v219 = vunpack.c.l.b16 %v51
  %v220 = vunpack.c.l.b16 %v52
  %v221 = vunpack.c.l.b16 %v53
  %v222 = vunpack.c.l.b16 %v54
  %v223 = vunpack.c.l.b16 %v55
  %v224 = vunpack.c.l.b16 %v56
  %v225 = vunpack.c.l.b16 %v57
  %v226 = vunpack.c.l.b16 %v58
  %v227 = vunpack.c.l.b16 %v59
  %v228 = vunpack.c.l.b16 %v60
  %v229 = vunpack.c.l.b16 %v61
  %v230 = vunpack.c.l.b16 %v62
  %v231 = vunpack.c.l.b16 %v63
  %v232 = vunpack.c.l.b16 %v64
  %v233 = vunpack.c.l.b16 %v65
  %v234 = vunpack.c.l.b16 %v66
  %v235 = vunpack.c.l.b16 %v67
  %v236 = vunpack.c.l.b16 %v68
  %v237 = vunpack.c.l.b16 %v69
  %v238 = vunpack.c.l.b16 %v70
  %v239 = vunpack.c.l.b16 %v71
  %v240 = vunpack.c.l.b16 %v72
  %v241 = vunpack.c.l.b16 %v73
  %v242 = vunpack.c.l.b16 %v74
  %v243 = vunpack.c.l.b16 %v75
  %v244 = vunpack.c.l.b16 %v76
  %v245 = vunpack.c.l.b16 %v77
  %v246 = vunpack.c.l.b16 %v78
  %v247 = vunpack.c.l.b16 %v79
  %v248 = vunpack.c.l.b16 %v80
  %v249 = vunpack.c.l.b16 %v81
  %v250 = vunpack.c.l.b16 %v82
  %v251 = vunpack.c.l.b16 %v83
  %v252 = vunpack.c.l.b16 %v84
  %v253 = vunpack.c.l.b16 %v85
  %v254 = vunpack.c.l.b16 %v86
  %v255 = vunpack.c.l.b16 %v87
  %v256 = vunpack.c.l.b16 %v88
  %v257 = vunpack.c.l.b16 %v89
  %v258 = vpack.c.b16 %v187, %v186
  %v259 = vpack.c.b16 %v189, %v188
  %v260 = vpack.c.b16 %v191, %v190
  %v261 = vpack.c.b16 %v193, %v192
  %v262 = vpack.c.b16 %v195, %v194
  %v263 = vpack.c.b16 %v197, %v196
  %v264 = vpack.c.b16 %v199, %v198
  %v265 = vpack.c.b16 %v201, %v200
  %v266 = vpack.c.b16 %v203, %v202
  %v267 = vpack.c.b16 %v205, %v204
  %v268 = vpack.c.b16 %v207, %v206
  %v269 = vpack.c.b16 %v209, %v208
  %v270 = vpack.c.b16 %v211, %v210
  %v271 = vpack.c.b16 %v213, %v212
  %v272 = vpack.c.b16 %v215, %v214
  %v273 = vpack.c.b16 %v217, %v216
  %v274 = vpack.c.b16 %v219, %v218
  %v275 = vpack.c.b16 %v221, %v220
  %v276 = vpack.c.b16 %v223, %v222
  %v277 = vpack.c.b16 %v225, %v224
  %v278 = vpack.c.b16 %v227, %v226
  %v279 = vpack.c.b16 %v229, %v228
  %v280 = vpack.c.b16 %v231, %v230
  %v281 = vpack.c.b16 %v233, %v232
  %v282 = vpack.c.b16 %v235, %v234
  %v283 = vpack.c.b16 %v237, %v236
  %v284 = vpack.c.b16 %v239, %v238
  %v285 = vpack.c.b16 %v241, %v240
  %v286 = vpack.c.b16 %v243, %v242
  %v287 = vpack.c.b16 %v245, %v244
  %v288 = vpack.c.b16 %v247, %v246
  %v289 = vpack.c.b16 %v249, %v248
  %v290 = vpack.c.b16 %v251, %v250
  %v291 = vpack.c.b16 %v253, %v252
  %v292 = vpack.c.b16 %v255, %v254
  %v293 = vpack.c.b16 %v257, %v256
  %vm330 = vcmask 523264
  %v332 = vsel %vm330, %v109, 0
  %334 = vmatprep.subr.bf16.mxu0 0
  %335 = vmatpush1.bf16.msra.mxu0 %v265
  %336 = vmatprep.subr.bf16.mxu0 0
  %337 = vmatpush1.bf16.msra.mxu0 %v264
  %338 = vmatprep.subr.bf16.mxu0 0
  %339 = vmatpush1.bf16.msra.mxu0 %v263
  %340 = vmatprep.subr.bf16.mxu0 0
  %341 = vmatpush1.bf16.msra.mxu0 %v262
  %342 = vmatprep.subr.bf16.mxu0 0
  %343 = vmatpush1.bf16.msra.mxu0 %v261
  %344 = vmatprep.subr.bf16.mxu0 0
  %345 = vmatpush1.bf16.msra.mxu0 %v260
  %346 = vmatprep.subr.bf16.mxu0 0
  %347 = vmatpush1.bf16.msra.mxu0 %v259
  %348 = vmatprep.subr.bf16.mxu0 0
  %349 = vmatpush1.bf16.msra.mxu0 %v258
  %350 = vmatprep.subr.bf16.mxu0 0
  %351 = vmatpush2.bf16.msra.mxu0 %v273
  %352 = vmatprep.subr.bf16.mxu0 0
  %353 = vmatpush2.bf16.msra.mxu0 %v272
  %354 = vmatprep.subr.bf16.mxu0 0
  %355 = vmatpush2.bf16.msra.mxu0 %v271
  %356 = vmatprep.subr.bf16.mxu0 0
  %357 = vmatpush2.bf16.msra.mxu0 %v270
  %358 = vmatprep.subr.bf16.mxu0 0
  %359 = vmatpush2.bf16.msra.mxu0 %v269
  %360 = vmatprep.subr.bf16.mxu0 0
  %361 = vmatpush2.bf16.msra.mxu0 %v268
  %362 = vmatprep.subr.bf16.mxu0 0
  %363 = vmatpush2.bf16.msra.mxu0 %v267
  %364 = vmatprep.subr.bf16.mxu0 0
  %365 = vmatpush2.bf16.msra.mxu0 %v266
  %366 = vmatprep.mubr.bf16.mxu0 %v106
  %367 = vmatmul.mubr.bf16.gmra.mxu0 %v105
  %v368 = vpop.f32.mrf.mxu0
  %v369 = vadd.f32 %v95, %v368
  %v370 = vpop.f32.mrf.mxu0
  %v371 = vpop.f32.mrf.mxu0
  %v372 = vpop.f32.mrf.mxu0
  %373 = vdwg.mxu0
  %374 = vmatprep.subr.bf16.mxu0 0
  %375 = vmatpush1.bf16.msra.mxu0 %v281
  %376 = vmatprep.subr.bf16.mxu0 0
  %377 = vmatpush1.bf16.msra.mxu0 %v280
  %378 = vmatprep.subr.bf16.mxu0 0
  %379 = vmatpush1.bf16.msra.mxu0 %v279
  %380 = vmatprep.subr.bf16.mxu0 0
  %381 = vmatpush1.bf16.msra.mxu0 %v278
  %382 = vmatprep.subr.bf16.mxu0 0
  %383 = vmatpush1.bf16.msra.mxu0 %v277
  %384 = vmatprep.subr.bf16.mxu0 0
  %385 = vmatpush1.bf16.msra.mxu0 %v276
  %386 = vmatprep.subr.bf16.mxu0 0
  %387 = vmatpush1.bf16.msra.mxu0 %v275
  %388 = vmatprep.subr.bf16.mxu0 0
  %389 = vmatpush1.bf16.msra.mxu0 %v274
  %390 = vmatprep.subr.bf16.mxu0 0
  %391 = vmatpush2.bf16.msra.mxu0 %v289
  %392 = vmatprep.subr.bf16.mxu0 0
  %393 = vmatpush2.bf16.msra.mxu0 %v288
  %394 = vmatprep.subr.bf16.mxu0 0
  %395 = vmatpush2.bf16.msra.mxu0 %v287
  %396 = vmatprep.subr.bf16.mxu0 0
  %397 = vmatpush2.bf16.msra.mxu0 %v286
  %398 = vmatprep.subr.bf16.mxu0 0
  %399 = vmatpush2.bf16.msra.mxu0 %v285
  %400 = vmatprep.subr.bf16.mxu0 0
  %401 = vmatpush2.bf16.msra.mxu0 %v284
  %402 = vmatprep.subr.bf16.mxu0 0
  %403 = vmatpush2.bf16.msra.mxu0 %v283
  %404 = vmatprep.subr.bf16.mxu0 0
  %405 = vmatpush2.bf16.msra.mxu0 %v282
  %406 = vmatprep.mubr.bf16.mxu0 %v108
  %407 = vmatmul.mubr.bf16.gmra.mxu0 %v107
  %v408 = vpop.f32.mrf.mxu0
  %v409 = vadd.f32 %v369, %v408
  %v410 = vpop.f32.mrf.mxu0
  %v411 = vpop.f32.mrf.mxu0
  %v412 = vpop.f32.mrf.mxu0
  %413 = vdwg.mxu0
  %414 = vmatprep.subr.bf16.mxu0 0
  %415 = vmatpush1.bf16.msra.mxu0 0
  %416 = vmatprep.subr.bf16.mxu0 0
  %417 = vmatpush1.bf16.msra.mxu0 0
  %418 = vmatprep.subr.bf16.mxu0 0
  %419 = vmatpush1.bf16.msra.mxu0 0
  %420 = vmatprep.subr.bf16.mxu0 0
  %421 = vmatpush1.bf16.msra.mxu0 0
  %422 = vmatprep.subr.bf16.mxu0 0
  %423 = vmatpush1.bf16.msra.mxu0 %v293
  %424 = vmatprep.subr.bf16.mxu0 0
  %425 = vmatpush1.bf16.msra.mxu0 %v292
  %426 = vmatprep.subr.bf16.mxu0 0
  %427 = vmatpush1.bf16.msra.mxu0 %v291
  %428 = vmatprep.subr.bf16.mxu0 0
  %429 = vmatpush1.bf16.msra.mxu0 %v290
  %430 = vmatprep.subr.bf16.mxu0 0
  %431 = vmatpush2.bf16.msra.mxu0 0
  %432 = vmatprep.subr.bf16.mxu0 0
  %433 = vmatpush2.bf16.msra.mxu0 0
  %434 = vmatprep.subr.bf16.mxu0 0
  %435 = vmatpush2.bf16.msra.mxu0 0
  %436 = vmatprep.subr.bf16.mxu0 0
  %437 = vmatpush2.bf16.msra.mxu0 0
  %438 = vmatprep.subr.bf16.mxu0 0
  %439 = vmatpush2.bf16.msra.mxu0 0
  %440 = vmatprep.subr.bf16.mxu0 0
  %441 = vmatpush2.bf16.msra.mxu0 0
  %442 = vmatprep.subr.bf16.mxu0 0
  %443 = vmatpush2.bf16.msra.mxu0 0
  %444 = vmatprep.subr.bf16.mxu0 0
  %445 = vmatpush2.bf16.msra.mxu0 0
  %446 = vmatprep.mubr.bf16.mxu0 0
  %447 = vmatmul.mubr.bf16.gmra.mxu0 %v332
  %v448 = vpop.f32.mrf.mxu0
  %v449 = vadd.f32 %v409, %v448
  %v450 = vpop.f32.mrf.mxu0
  %v451 = vpop.f32.mrf.mxu0
  %v452 = vpop.f32.mrf.mxu0
  %453 = vdwg.mxu0
  %v454 = vmax.f32 %v449, 0.0
  %455 = vst [vmem:[%s3] sm:$0xff] %v454
  // Predicated region
  $region14: #{image_inpainting_autoencoder_forward.8} parent=0 // pred_check
    _
  $region15: #{image_inpainting_autoencoder_forward.8} parent=0 // pred_check_branch
    %457 = sbr.rel (0) target = $region17
  $region16: #{image_inpainting_autoencoder_forward.8} parent=0 // pred_region
    _
  $region17: #{image_inpainting_autoencoder_forward.8} parent=0 // pred_fallthru
    _
  // Predicated region
  $region18: #{image_inpainting_autoencoder_forward.8} parent=0 // pred_check
    _
  $region19: #{image_inpainting_autoencoder_forward.8} parent=0 // pred_check_branch
    %459 = sbr.rel (0) target = $region21
  $region20: #{image_inpainting_autoencoder_forward.8} parent=0 // pred_region
    _
  $region21: #{image_inpainting_autoencoder_forward.8} parent=0 // pred_fallthru
    _

// kernel: image_inpainting_autoencoder_forward.9
$region0: #{image_inpainting_autoencoder_forward.9}
  #allocation0 [shape = 'u32[]', space=smem, size = 0x4, offset = 0x4, fixed_abs, tag = 'smem constant byte address 0x4 - core index']
  #allocation1 [shape = 'u32[144,128]{1,0:T(1,128)}', space=vmem, size = 0x12000, scoped, tag = 'internal scratch']
  %s0 = inlined_call_operand.vmem [shape: bf16[8,512], index: 0, kind: input, shape index: {}]
  %s1 = inlined_call_operand.vmem [shape: bf16[512,256], index: 1, kind: input, shape index: {}]
  %s2 = inlined_call_operand.vmem [shape: f32[1,256], index: 2, kind: input, shape index: {}]
  %s3 = inlined_call_operand.vmem [shape: f32[8,256], index: 3, kind: output, shape index: {}]
  %s4 = sld [smem:[#allocation0]]
  $region22: #{image_inpainting_autoencoder_forward.9} parent=0
    _
  %s6 = ssub.s32 1, %s4
  %s7 = scalar_select 0, %s6, %s4
  // Predicated region
  $region2: #{image_inpainting_autoencoder_forward.9} parent=0 // pred_check
    _
  $region3: #{image_inpainting_autoencoder_forward.9} parent=0 // pred_check_branch
    %9 = sbr.rel (0) target = $region5
  $region4: #{image_inpainting_autoencoder_forward.9} parent=0 // pred_region
    _
  $region5: #{image_inpainting_autoencoder_forward.9} parent=0 // pred_fallthru
    _
  // Predicated region
  $region6: #{image_inpainting_autoencoder_forward.9} parent=0 // pred_check
    _
  $region7: #{image_inpainting_autoencoder_forward.9} parent=0 // pred_check_branch
    %11 = sbr.rel (0) target = $region9
  $region8: #{image_inpainting_autoencoder_forward.9} parent=0 // pred_region
    _
  $region9: #{image_inpainting_autoencoder_forward.9} parent=0 // pred_fallthru
    _
  // Predicated region
  $region10: #{image_inpainting_autoencoder_forward.9} parent=0 // pred_check
    _
  $region11: #{image_inpainting_autoencoder_forward.9} parent=0 // pred_check_branch
    %13 = sbr.rel (0) target = $region13
  $region12: #{image_inpainting_autoencoder_forward.9} parent=0 // pred_region
    _
  $region13: #{image_inpainting_autoencoder_forward.9} parent=0 // pred_fallthru
    _
  %v14 = vld [vmem:[%s0] sm:$0xff]
  %v15 = vld [vmem:[%s0 + $0x8] sm:$0xff]
  %v16 = vld [vmem:[%s1] sm:$0xff]
  %v17 = vld [vmem:[%s1 + $0x8] sm:$0xff]
  %v18 = vld [vmem:[%s1 + $0x10] sm:$0xff]
  %v19 = vld [vmem:[%s1 + $0x18] sm:$0xff]
  %v20 = vld [vmem:[%s1 + $0x20] sm:$0xff]
  %v21 = vld [vmem:[%s1 + $0x28] sm:$0xff]
  %v22 = vld [vmem:[%s1 + $0x30] sm:$0xff]
  %v23 = vld [vmem:[%s1 + $0x38] sm:$0xff]
  %v24 = vld [vmem:[%s1 + $0x40] sm:$0xff]
  %v25 = vld [vmem:[%s1 + $0x48] sm:$0xff]
  %v26 = vld [vmem:[%s1 + $0x50] sm:$0xff]
  %v27 = vld [vmem:[%s1 + $0x58] sm:$0xff]
  %v28 = vld [vmem:[%s1 + $0x60] sm:$0xff]
  %v29 = vld [vmem:[%s1 + $0x68] sm:$0xff]
  %v30 = vld [vmem:[%s1 + $0x70] sm:$0xff]
  %v31 = vld [vmem:[%s1 + $0x78] sm:$0xff]
  %v32 = vld [vmem:[%s1 + $0x80] sm:$0xff]
  %v33 = vld [vmem:[%s1 + $0x88] sm:$0xff]
  %v34 = vld [vmem:[%s1 + $0x90] sm:$0xff]
  %v35 = vld [vmem:[%s1 + $0x98] sm:$0xff]
  %v36 = vld [vmem:[%s1 + $0xa0] sm:$0xff]
  %v37 = vld [vmem:[%s1 + $0xa8] sm:$0xff]
  %v38 = vld [vmem:[%s1 + $0xb0] sm:$0xff]
  %v39 = vld [vmem:[%s1 + $0xb8] sm:$0xff]
  %v40 = vld [vmem:[%s1 + $0xc0] sm:$0xff]
  %v41 = vld [vmem:[%s1 + $0xc8] sm:$0xff]
  %v42 = vld [vmem:[%s1 + $0xd0] sm:$0xff]
  %v43 = vld [vmem:[%s1 + $0xd8] sm:$0xff]
  %v44 = vld [vmem:[%s1 + $0xe0] sm:$0xff]
  %v45 = vld [vmem:[%s1 + $0xe8] sm:$0xff]
  %v46 = vld [vmem:[%s1 + $0xf0] sm:$0xff]
  %v47 = vld [vmem:[%s1 + $0xf8] sm:$0xff]
  %v48 = vld [vmem:[%s1 + $0x100] sm:$0xff]
  %v49 = vld [vmem:[%s1 + $0x108] sm:$0xff]
  %v50 = vld [vmem:[%s1 + $0x110] sm:$0xff]
  %v51 = vld [vmem:[%s1 + $0x118] sm:$0xff]
  %v52 = vld [vmem:[%s1 + $0x120] sm:$0xff]
  %v53 = vld [vmem:[%s1 + $0x128] sm:$0xff]
  %v54 = vld [vmem:[%s1 + $0x130] sm:$0xff]
  %v55 = vld [vmem:[%s1 + $0x138] sm:$0xff]
  %v56 = vld [vmem:[%s1 + $0x140] sm:$0xff]
  %v57 = vld [vmem:[%s1 + $0x148] sm:$0xff]
  %v58 = vld [vmem:[%s1 + $0x150] sm:$0xff]
  %v59 = vld [vmem:[%s1 + $0x158] sm:$0xff]
  %v60 = vld [vmem:[%s1 + $0x160] sm:$0xff]
  %v61 = vld [vmem:[%s1 + $0x168] sm:$0xff]
  %v62 = vld [vmem:[%s1 + $0x170] sm:$0xff]
  %v63 = vld [vmem:[%s1 + $0x178] sm:$0xff]
  %v64 = vld [vmem:[%s1 + $0x180] sm:$0xff]
  %v65 = vld [vmem:[%s1 + $0x188] sm:$0xff]
  %v66 = vld [vmem:[%s1 + $0x190] sm:$0xff]
  %v67 = vld [vmem:[%s1 + $0x198] sm:$0xff]
  %v68 = vld [vmem:[%s1 + $0x1a0] sm:$0xff]
  %v69 = vld [vmem:[%s1 + $0x1a8] sm:$0xff]
  %v70 = vld [vmem:[%s1 + $0x1b0] sm:$0xff]
  %v71 = vld [vmem:[%s1 + $0x1b8] sm:$0xff]
  %v72 = vld [vmem:[%s1 + $0x1c0] sm:$0xff]
  %v73 = vld [vmem:[%s1 + $0x1c8] sm:$0xff]
  %v74 = vld [vmem:[%s1 + $0x1d0] sm:$0xff]
  %v75 = vld [vmem:[%s1 + $0x1d8] sm:$0xff]
  %v76 = vld [vmem:[%s1 + $0x1e0] sm:$0xff]
  %v77 = vld [vmem:[%s1 + $0x1e8] sm:$0xff]
  %v78 = vld [vmem:[%s1 + $0x1f0] sm:$0xff]
  %v79 = vld [vmem:[%s1 + $0x1f8] sm:$0xff]
  %v80 = vld [vmem:[%s2] sm:$0x3]
  %v82 = vlaneseq
  %v83 = vshrl.u32 %v82, 7
  %v84 = vsub.s32 0, %v83
  %v85 = vrot.slane %v80, %v84
  %v86 = vlaneseq
  %v87 = vshrl.u32 %v86, 7
  %v88 = vsub.s32 1, %v87
  %v89 = vrot.slane %v80, %v88
  %v94 = vunpack.c.l.b16 %v14
  %v95 = vunpack.c.h.b16 %v14
  %v96 = vunpack.c.l.b16 %v15
  %v97 = vunpack.c.h.b16 %v15
  %v98 = vpack.c.b16 %v94, %v94
  %v99 = vpack.c.b16 %v95, %v95
  %v100 = vpack.c.b16 %v96, %v96
  %v101 = vpack.c.b16 %v97, %v97
  %v170 = vunpack.c.l.b16 %v16
  %v171 = vunpack.c.h.b16 %v16
  %v172 = vunpack.c.l.b16 %v17
  %v173 = vunpack.c.h.b16 %v17
  %v174 = vunpack.c.l.b16 %v18
  %v175 = vunpack.c.h.b16 %v18
  %v176 = vunpack.c.l.b16 %v19
  %v177 = vunpack.c.h.b16 %v19
  %v178 = vunpack.c.l.b16 %v20
  %v179 = vunpack.c.h.b16 %v20
  %v180 = vunpack.c.l.b16 %v21
  %v181 = vunpack.c.h.b16 %v21
  %v182 = vunpack.c.l.b16 %v22
  %v183 = vunpack.c.h.b16 %v22
  %v184 = vunpack.c.l.b16 %v23
  %v185 = vunpack.c.h.b16 %v23
  %v186 = vunpack.c.l.b16 %v24
  %v187 = vunpack.c.h.b16 %v24
  %v188 = vunpack.c.l.b16 %v25
  %v189 = vunpack.c.h.b16 %v25
  %v190 = vunpack.c.l.b16 %v26
  %v191 = vunpack.c.h.b16 %v26
  %v192 = vunpack.c.l.b16 %v27
  %v193 = vunpack.c.h.b16 %v27
  %v194 = vunpack.c.l.b16 %v28
  %v195 = vunpack.c.h.b16 %v28
  %v196 = vunpack.c.l.b16 %v29
  %v197 = vunpack.c.h.b16 %v29
  %v198 = vunpack.c.l.b16 %v30
  %v199 = vunpack.c.h.b16 %v30
  %v200 = vunpack.c.l.b16 %v31
  %v201 = vunpack.c.h.b16 %v31
  %v202 = vunpack.c.l.b16 %v32
  %v203 = vunpack.c.h.b16 %v32
  %v204 = vunpack.c.l.b16 %v33
  %v205 = vunpack.c.h.b16 %v33
  %v206 = vunpack.c.l.b16 %v34
  %v207 = vunpack.c.h.b16 %v34
  %v208 = vunpack.c.l.b16 %v35
  %v209 = vunpack.c.h.b16 %v35
  %v210 = vunpack.c.l.b16 %v36
  %v211 = vunpack.c.h.b16 %v36
  %v212 = vunpack.c.l.b16 %v37
  %v213 = vunpack.c.h.b16 %v37
  %v214 = vunpack.c.l.b16 %v38
  %v215 = vunpack.c.h.b16 %v38
  %v216 = vunpack.c.l.b16 %v39
  %v217 = vunpack.c.h.b16 %v39
  %v218 = vunpack.c.l.b16 %v40
  %v219 = vunpack.c.h.b16 %v40
  %v220 = vunpack.c.l.b16 %v41
  %v221 = vunpack.c.h.b16 %v41
  %v222 = vunpack.c.l.b16 %v42
  %v223 = vunpack.c.h.b16 %v42
  %v224 = vunpack.c.l.b16 %v43
  %v225 = vunpack.c.h.b16 %v43
  %v226 = vunpack.c.l.b16 %v44
  %v227 = vunpack.c.h.b16 %v44
  %v228 = vunpack.c.l.b16 %v45
  %v229 = vunpack.c.h.b16 %v45
  %v230 = vunpack.c.l.b16 %v46
  %v231 = vunpack.c.h.b16 %v46
  %v232 = vunpack.c.l.b16 %v47
  %v233 = vunpack.c.h.b16 %v47
  %v234 = vunpack.c.l.b16 %v48
  %v235 = vunpack.c.h.b16 %v48
  %v236 = vunpack.c.l.b16 %v49
  %v237 = vunpack.c.h.b16 %v49
  %v238 = vunpack.c.l.b16 %v50
  %v239 = vunpack.c.h.b16 %v50
  %v240 = vunpack.c.l.b16 %v51
  %v241 = vunpack.c.h.b16 %v51
  %v242 = vunpack.c.l.b16 %v52
  %v243 = vunpack.c.h.b16 %v52
  %v244 = vunpack.c.l.b16 %v53
  %v245 = vunpack.c.h.b16 %v53
  %v246 = vunpack.c.l.b16 %v54
  %v247 = vunpack.c.h.b16 %v54
  %v248 = vunpack.c.l.b16 %v55
  %v249 = vunpack.c.h.b16 %v55
  %v250 = vunpack.c.l.b16 %v56
  %v251 = vunpack.c.h.b16 %v56
  %v252 = vunpack.c.l.b16 %v57
  %v253 = vunpack.c.h.b16 %v57
  %v254 = vunpack.c.l.b16 %v58
  %v255 = vunpack.c.h.b16 %v58
  %v256 = vunpack.c.l.b16 %v59
  %v257 = vunpack.c.h.b16 %v59
  %v258 = vunpack.c.l.b16 %v60
  %v259 = vunpack.c.h.b16 %v60
  %v260 = vunpack.c.l.b16 %v61
  %v261 = vunpack.c.h.b16 %v61
  %v262 = vunpack.c.l.b16 %v62
  %v263 = vunpack.c.h.b16 %v62
  %v264 = vunpack.c.l.b16 %v63
  %v265 = vunpack.c.h.b16 %v63
  %v266 = vunpack.c.l.b16 %v64
  %v267 = vunpack.c.h.b16 %v64
  %v268 = vunpack.c.l.b16 %v65
  %v269 = vunpack.c.h.b16 %v65
  %v270 = vunpack.c.l.b16 %v66
  %v271 = vunpack.c.h.b16 %v66
  %v272 = vunpack.c.l.b16 %v67
  %v273 = vunpack.c.h.b16 %v67
  %v274 = vunpack.c.l.b16 %v68
  %v275 = vunpack.c.h.b16 %v68
  %v276 = vunpack.c.l.b16 %v69
  %v277 = vunpack.c.h.b16 %v69
  %v278 = vunpack.c.l.b16 %v70
  %v279 = vunpack.c.h.b16 %v70
  %v280 = vunpack.c.l.b16 %v71
  %v281 = vunpack.c.h.b16 %v71
  %v282 = vunpack.c.l.b16 %v72
  %v283 = vunpack.c.h.b16 %v72
  %v284 = vunpack.c.l.b16 %v73
  %v285 = vunpack.c.h.b16 %v73
  %v286 = vunpack.c.l.b16 %v74
  %v287 = vunpack.c.h.b16 %v74
  %v288 = vunpack.c.l.b16 %v75
  %v289 = vunpack.c.h.b16 %v75
  %v290 = vunpack.c.l.b16 %v76
  %v291 = vunpack.c.h.b16 %v76
  %v292 = vunpack.c.l.b16 %v77
  %v293 = vunpack.c.h.b16 %v77
  %v294 = vunpack.c.l.b16 %v78
  %v295 = vunpack.c.h.b16 %v78
  %v296 = vunpack.c.l.b16 %v79
  %v297 = vunpack.c.h.b16 %v79
  %v298 = vpack.c.b16 %v172, %v170
  %v299 = vpack.c.b16 %v173, %v171
  %v300 = vpack.c.b16 %v176, %v174
  %v301 = vpack.c.b16 %v177, %v175
  %v302 = vpack.c.b16 %v180, %v178
  %v303 = vpack.c.b16 %v181, %v179
  %v304 = vpack.c.b16 %v184, %v182
  %v305 = vpack.c.b16 %v185, %v183
  %v306 = vpack.c.b16 %v188, %v186
  %v307 = vpack.c.b16 %v189, %v187
  %v308 = vpack.c.b16 %v192, %v190
  %v309 = vpack.c.b16 %v193, %v191
  %v310 = vpack.c.b16 %v196, %v194
  %v311 = vpack.c.b16 %v197, %v195
  %v312 = vpack.c.b16 %v200, %v198
  %v313 = vpack.c.b16 %v201, %v199
  %v314 = vpack.c.b16 %v204, %v202
  %v315 = vpack.c.b16 %v205, %v203
  %v316 = vpack.c.b16 %v208, %v206
  %v317 = vpack.c.b16 %v209, %v207
  %v318 = vpack.c.b16 %v212, %v210
  %v319 = vpack.c.b16 %v213, %v211
  %v320 = vpack.c.b16 %v216, %v214
  %v321 = vpack.c.b16 %v217, %v215
  %v322 = vpack.c.b16 %v220, %v218
  %v323 = vpack.c.b16 %v221, %v219
  %v324 = vpack.c.b16 %v224, %v222
  %v325 = vpack.c.b16 %v225, %v223
  %v326 = vpack.c.b16 %v228, %v226
  %v327 = vpack.c.b16 %v229, %v227
  %v328 = vpack.c.b16 %v232, %v230
  %v329 = vpack.c.b16 %v233, %v231
  %v330 = vpack.c.b16 %v236, %v234
  %v331 = vpack.c.b16 %v237, %v235
  %v332 = vpack.c.b16 %v240, %v238
  %v333 = vpack.c.b16 %v241, %v239
  %v334 = vpack.c.b16 %v244, %v242
  %v335 = vpack.c.b16 %v245, %v243
  %v336 = vpack.c.b16 %v248, %v246
  %v337 = vpack.c.b16 %v249, %v247
  %v338 = vpack.c.b16 %v252, %v250
  %v339 = vpack.c.b16 %v253, %v251
  %v340 = vpack.c.b16 %v256, %v254
  %v341 = vpack.c.b16 %v257, %v255
  %v342 = vpack.c.b16 %v260, %v258
  %v343 = vpack.c.b16 %v261, %v259
  %v344 = vpack.c.b16 %v264, %v262
  %v345 = vpack.c.b16 %v265, %v263
  %v346 = vpack.c.b16 %v268, %v266
  %v347 = vpack.c.b16 %v269, %v267
  %v348 = vpack.c.b16 %v272, %v270
  %v349 = vpack.c.b16 %v273, %v271
  %v350 = vpack.c.b16 %v276, %v274
  %v351 = vpack.c.b16 %v277, %v275
  %v352 = vpack.c.b16 %v280, %v278
  %v353 = vpack.c.b16 %v281, %v279
  %v354 = vpack.c.b16 %v284, %v282
  %v355 = vpack.c.b16 %v285, %v283
  %v356 = vpack.c.b16 %v288, %v286
  %v357 = vpack.c.b16 %v289, %v287
  %v358 = vpack.c.b16 %v292, %v290
  %v359 = vpack.c.b16 %v293, %v291
  %v360 = vpack.c.b16 %v296, %v294
  %v361 = vpack.c.b16 %v297, %v295
  %426 = vmatprep.subr.bf16.mxu0 %v313
  %427 = vmatpush1.bf16.msra.mxu0 %v312
  %428 = vmatprep.subr.bf16.mxu0 %v311
  %429 = vmatpush1.bf16.msra.mxu0 %v310
  %430 = vmatprep.subr.bf16.mxu0 %v309
  %431 = vmatpush1.bf16.msra.mxu0 %v308
  %432 = vmatprep.subr.bf16.mxu0 %v307
  %433 = vmatpush1.bf16.msra.mxu0 %v306
  %434 = vmatprep.subr.bf16.mxu0 %v305
  %435 = vmatpush1.bf16.msra.mxu0 %v304
  %436 = vmatprep.subr.bf16.mxu0 %v303
  %437 = vmatpush1.bf16.msra.mxu0 %v302
  %438 = vmatprep.subr.bf16.mxu0 %v301
  %439 = vmatpush1.bf16.msra.mxu0 %v300
  %440 = vmatprep.subr.bf16.mxu0 %v299
  %441 = vmatpush1.bf16.msra.mxu0 %v298
  %442 = vmatprep.subr.bf16.mxu0 %v329
  %443 = vmatpush2.bf16.msra.mxu0 %v328
  %444 = vmatprep.subr.bf16.mxu0 %v327
  %445 = vmatpush2.bf16.msra.mxu0 %v326
  %446 = vmatprep.subr.bf16.mxu0 %v325
  %447 = vmatpush2.bf16.msra.mxu0 %v324
  %448 = vmatprep.subr.bf16.mxu0 %v323
  %449 = vmatpush2.bf16.msra.mxu0 %v322
  %450 = vmatprep.subr.bf16.mxu0 %v321
  %451 = vmatpush2.bf16.msra.mxu0 %v320
  %452 = vmatprep.subr.bf16.mxu0 %v319
  %453 = vmatpush2.bf16.msra.mxu0 %v318
  %454 = vmatprep.subr.bf16.mxu0 %v317
  %455 = vmatpush2.bf16.msra.mxu0 %v316
  %456 = vmatprep.subr.bf16.mxu0 %v315
  %457 = vmatpush2.bf16.msra.mxu0 %v314
  %458 = vmatprep.mubr.bf16.mxu0 %v99
  %459 = vmatmul.mubr.bf16.gmra.mxu0 %v98
  %v460 = vpop.f32.mrf.mxu0
  %v461 = vadd.f32 %v85, %v460
  %v462 = vpop.f32.mrf.mxu0
  %v463 = vadd.f32 %v89, %v462
  %v464 = vpop.f32.mrf.mxu0
  %v465 = vpop.f32.mrf.mxu0
  %466 = vdwg.mxu0
  %467 = vmatprep.subr.bf16.mxu0 %v345
  %468 = vmatpush1.bf16.msra.mxu0 %v344
  %469 = vmatprep.subr.bf16.mxu0 %v343
  %470 = vmatpush1.bf16.msra.mxu0 %v342
  %471 = vmatprep.subr.bf16.mxu0 %v341
  %472 = vmatpush1.bf16.msra.mxu0 %v340
  %473 = vmatprep.subr.bf16.mxu0 %v339
  %474 = vmatpush1.bf16.msra.mxu0 %v338
  %475 = vmatprep.subr.bf16.mxu0 %v337
  %476 = vmatpush1.bf16.msra.mxu0 %v336
  %477 = vmatprep.subr.bf16.mxu0 %v335
  %478 = vmatpush1.bf16.msra.mxu0 %v334
  %479 = vmatprep.subr.bf16.mxu0 %v333
  %480 = vmatpush1.bf16.msra.mxu0 %v332
  %481 = vmatprep.subr.bf16.mxu0 %v331
  %482 = vmatpush1.bf16.msra.mxu0 %v330
  %483 = vmatprep.subr.bf16.mxu0 %v361
  %484 = vmatpush2.bf16.msra.mxu0 %v360
  %485 = vmatprep.subr.bf16.mxu0 %v359
  %486 = vmatpush2.bf16.msra.mxu0 %v358
  %487 = vmatprep.subr.bf16.mxu0 %v357
  %488 = vmatpush2.bf16.msra.mxu0 %v356
  %489 = vmatprep.subr.bf16.mxu0 %v355
  %490 = vmatpush2.bf16.msra.mxu0 %v354
  %491 = vmatprep.subr.bf16.mxu0 %v353
  %492 = vmatpush2.bf16.msra.mxu0 %v352
  %493 = vmatprep.subr.bf16.mxu0 %v351
  %494 = vmatpush2.bf16.msra.mxu0 %v350
  %495 = vmatprep.subr.bf16.mxu0 %v349
  %496 = vmatpush2.bf16.msra.mxu0 %v348
  %497 = vmatprep.subr.bf16.mxu0 %v347
  %498 = vmatpush2.bf16.msra.mxu0 %v346
  %499 = vmatprep.mubr.bf16.mxu0 %v101
  %500 = vmatmul.mubr.bf16.gmra.mxu0 %v100
  %v501 = vpop.f32.mrf.mxu0
  %v502 = vadd.f32 %v461, %v501
  %v503 = vpop.f32.mrf.mxu0
  %v504 = vadd.f32 %v463, %v503
  %v505 = vpop.f32.mrf.mxu0
  %v506 = vpop.f32.mrf.mxu0
  %507 = vdwg.mxu0
  %v508 = vmax.f32 %v502, 0.0
  %v509 = vmax.f32 %v504, 0.0
  %510 = vst [vmem:[%s3] sm:$0xff] %v508
  %511 = vst [vmem:[%s3 + $0x8] sm:$0xff] %v509
  // Predicated region
  $region14: #{image_inpainting_autoencoder_forward.9} parent=0 // pred_check
    _
  $region15: #{image_inpainting_autoencoder_forward.9} parent=0 // pred_check_branch
    %513 = sbr.rel (0) target = $region17
  $region16: #{image_inpainting_autoencoder_forward.9} parent=0 // pred_region
    _
  $region17: #{image_inpainting_autoencoder_forward.9} parent=0 // pred_fallthru
    _
  // Predicated region
  $region18: #{image_inpainting_autoencoder_forward.9} parent=0 // pred_check
    _
  $region19: #{image_inpainting_autoencoder_forward.9} parent=0 // pred_check_branch
    %515 = sbr.rel (0) target = $region21
  $region20: #{image_inpainting_autoencoder_forward.9} parent=0 // pred_region
    _
  $region21: #{image_inpainting_autoencoder_forward.9} parent=0 // pred_fallthru
    _

// kernel: image_inpainting_autoencoder_forward.10
$region0: #{image_inpainting_autoencoder_forward.10}
  #allocation0 [shape = 'u32[]', space=smem, size = 0x4, offset = 0x4, fixed_abs, tag = 'smem constant byte address 0x4 - core index']
  #allocation1 [shape = 'u32[144,128]{1,0:T(1,128)}', space=vmem, size = 0x12000, scoped, tag = 'internal scratch']
  %s0 = inlined_call_operand.vmem [shape: bf16[32,256], index: 0, kind: input, shape index: {}]
  %s1 = inlined_call_operand.vmem [shape: bf16[256,128], index: 1, kind: input, shape index: {}]
  %s2 = inlined_call_operand.vmem [shape: f32[1,128], index: 2, kind: input, shape index: {}]
  %s3 = inlined_call_operand.vmem [shape: f32[32,128], index: 3, kind: output, shape index: {}]
  %s4 = sld [smem:[#allocation0]]
  $region22: #{image_inpainting_autoencoder_forward.10} parent=0
    _
  %s6 = ssub.s32 1, %s4
  %s7 = scalar_select 0, %s6, %s4
  // Predicated region
  $region2: #{image_inpainting_autoencoder_forward.10} parent=0 // pred_check
    _
  $region3: #{image_inpainting_autoencoder_forward.10} parent=0 // pred_check_branch
    %9 = sbr.rel (0) target = $region5
  $region4: #{image_inpainting_autoencoder_forward.10} parent=0 // pred_region
    _
  $region5: #{image_inpainting_autoencoder_forward.10} parent=0 // pred_fallthru
    _
  // Predicated region
  $region6: #{image_inpainting_autoencoder_forward.10} parent=0 // pred_check
    _
  $region7: #{image_inpainting_autoencoder_forward.10} parent=0 // pred_check_branch
    %11 = sbr.rel (0) target = $region9
  $region8: #{image_inpainting_autoencoder_forward.10} parent=0 // pred_region
    _
  $region9: #{image_inpainting_autoencoder_forward.10} parent=0 // pred_fallthru
    _
  // Predicated region
  $region10: #{image_inpainting_autoencoder_forward.10} parent=0 // pred_check
    _
  $region11: #{image_inpainting_autoencoder_forward.10} parent=0 // pred_check_branch
    %13 = sbr.rel (0) target = $region13
  $region12: #{image_inpainting_autoencoder_forward.10} parent=0 // pred_region
    _
  $region13: #{image_inpainting_autoencoder_forward.10} parent=0 // pred_fallthru
    _
  %v15 = vld [vmem:[%s0] sm:$0xff]
  %v16 = vld [vmem:[%s0 + $0x8] sm:$0xff]
  %v17 = vld [vmem:[%s0 + $0x10] sm:$0xff]
  %v18 = vld [vmem:[%s0 + $0x18] sm:$0xff]
  %v19 = vld [vmem:[%s1] sm:$0xf]
  %v20 = vld [vmem:[%s1 + $0x4] sm:$0xf]
  %v21 = vld [vmem:[%s1 + $0x8] sm:$0xf]
  %v22 = vld [vmem:[%s1 + $0xc] sm:$0xf]
  %v23 = vld [vmem:[%s1 + $0x10] sm:$0xf]
  %v24 = vld [vmem:[%s1 + $0x14] sm:$0xf]
  %v25 = vld [vmem:[%s1 + $0x18] sm:$0xf]
  %v26 = vld [vmem:[%s1 + $0x1c] sm:$0xf]
  %v27 = vld [vmem:[%s1 + $0x20] sm:$0xf]
  %v28 = vld [vmem:[%s1 + $0x24] sm:$0xf]
  %v29 = vld [vmem:[%s1 + $0x28] sm:$0xf]
  %v30 = vld [vmem:[%s1 + $0x2c] sm:$0xf]
  %v31 = vld [vmem:[%s1 + $0x30] sm:$0xf]
  %v32 = vld [vmem:[%s1 + $0x34] sm:$0xf]
  %v33 = vld [vmem:[%s1 + $0x38] sm:$0xf]
  %v34 = vld [vmem:[%s1 + $0x3c] sm:$0xf]
  %v35 = vld [vmem:[%s1 + $0x40] sm:$0xf]
  %v36 = vld [vmem:[%s1 + $0x44] sm:$0xf]
  %v37 = vld [vmem:[%s1 + $0x48] sm:$0xf]
  %v38 = vld [vmem:[%s1 + $0x4c] sm:$0xf]
  %v39 = vld [vmem:[%s1 + $0x50] sm:$0xf]
  %v40 = vld [vmem:[%s1 + $0x54] sm:$0xf]
  %v41 = vld [vmem:[%s1 + $0x58] sm:$0xf]
  %v42 = vld [vmem:[%s1 + $0x5c] sm:$0xf]
  %v43 = vld [vmem:[%s1 + $0x60] sm:$0xf]
  %v44 = vld [vmem:[%s1 + $0x64] sm:$0xf]
  %v45 = vld [vmem:[%s1 + $0x68] sm:$0xf]
  %v46 = vld [vmem:[%s1 + $0x6c] sm:$0xf]
  %v47 = vld [vmem:[%s1 + $0x70] sm:$0xf]
  %v48 = vld [vmem:[%s1 + $0x74] sm:$0xf]
  %v49 = vld [vmem:[%s1 + $0x78] sm:$0xf]
  %v50 = vld [vmem:[%s1 + $0x7c] sm:$0xf]
  %v51 = vld [vmem:[%s2] sm:$0x1]
  %v53 = vlaneseq
  %v54 = vshrl.u32 %v53, 7
  %v55 = vsub.s32 0, %v54
  %v56 = vrot.slane %v51, %v55
  %v62 = vunpack.c.l.b16 %v15
  %v63 = vunpack.c.h.b16 %v15
  %v64 = vunpack.c.l.b16 %v16
  %v65 = vunpack.c.h.b16 %v16
  %v66 = vunpack.c.l.b16 %v17
  %v67 = vunpack.c.h.b16 %v17
  %v68 = vunpack.c.l.b16 %v18
  %v69 = vunpack.c.h.b16 %v18
  %v70 = vpack.c.b16 %v64, %v62
  %v71 = vpack.c.b16 %v65, %v63
  %v72 = vpack.c.b16 %v68, %v66
  %v73 = vpack.c.b16 %v69, %v67
  %v110 = vunpack.c.l.b16 %v19
  %v111 = vunpack.c.l.b16 %v20
  %v112 = vunpack.c.l.b16 %v21
  %v113 = vunpack.c.l.b16 %v22
  %v114 = vunpack.c.l.b16 %v23
  %v115 = vunpack.c.l.b16 %v24
  %v116 = vunpack.c.l.b16 %v25
  %v117 = vunpack.c.l.b16 %v26
  %v118 = vunpack.c.l.b16 %v27
  %v119 = vunpack.c.l.b16 %v28
  %v120 = vunpack.c.l.b16 %v29
  %v121 = vunpack.c.l.b16 %v30
  %v122 = vunpack.c.l.b16 %v31
  %v123 = vunpack.c.l.b16 %v32
  %v124 = vunpack.c.l.b16 %v33
  %v125 = vunpack.c.l.b16 %v34
  %v126 = vunpack.c.l.b16 %v35
  %v127 = vunpack.c.l.b16 %v36
  %v128 = vunpack.c.l.b16 %v37
  %v129 = vunpack.c.l.b16 %v38
  %v130 = vunpack.c.l.b16 %v39
  %v131 = vunpack.c.l.b16 %v40
  %v132 = vunpack.c.l.b16 %v41
  %v133 = vunpack.c.l.b16 %v42
  %v134 = vunpack.c.l.b16 %v43
  %v135 = vunpack.c.l.b16 %v44
  %v136 = vunpack.c.l.b16 %v45
  %v137 = vunpack.c.l.b16 %v46
  %v138 = vunpack.c.l.b16 %v47
  %v139 = vunpack.c.l.b16 %v48
  %v140 = vunpack.c.l.b16 %v49
  %v141 = vunpack.c.l.b16 %v50
  %v142 = vpack.c.b16 %v111, %v110
  %v143 = vpack.c.b16 %v113, %v112
  %v144 = vpack.c.b16 %v115, %v114
  %v145 = vpack.c.b16 %v117, %v116
  %v146 = vpack.c.b16 %v119, %v118
  %v147 = vpack.c.b16 %v121, %v120
  %v148 = vpack.c.b16 %v123, %v122
  %v149 = vpack.c.b16 %v125, %v124
  %v150 = vpack.c.b16 %v127, %v126
  %v151 = vpack.c.b16 %v129, %v128
  %v152 = vpack.c.b16 %v131, %v130
  %v153 = vpack.c.b16 %v133, %v132
  %v154 = vpack.c.b16 %v135, %v134
  %v155 = vpack.c.b16 %v137, %v136
  %v156 = vpack.c.b16 %v139, %v138
  %v157 = vpack.c.b16 %v141, %v140
  %174 = vmatprep.subr.bf16.mxu0 0
  %175 = vmatpush1.bf16.msra.mxu0 %v149
  %176 = vmatprep.subr.bf16.mxu0 0
  %177 = vmatpush1.bf16.msra.mxu0 %v148
  %178 = vmatprep.subr.bf16.mxu0 0
  %179 = vmatpush1.bf16.msra.mxu0 %v147
  %180 = vmatprep.subr.bf16.mxu0 0
  %181 = vmatpush1.bf16.msra.mxu0 %v146
  %182 = vmatprep.subr.bf16.mxu0 0
  %183 = vmatpush1.bf16.msra.mxu0 %v145
  %184 = vmatprep.subr.bf16.mxu0 0
  %185 = vmatpush1.bf16.msra.mxu0 %v144
  %186 = vmatprep.subr.bf16.mxu0 0
  %187 = vmatpush1.bf16.msra.mxu0 %v143
  %188 = vmatprep.subr.bf16.mxu0 0
  %189 = vmatpush1.bf16.msra.mxu0 %v142
  %190 = vmatprep.subr.bf16.mxu0 0
  %191 = vmatpush2.bf16.msra.mxu0 %v157
  %192 = vmatprep.subr.bf16.mxu0 0
  %193 = vmatpush2.bf16.msra.mxu0 %v156
  %194 = vmatprep.subr.bf16.mxu0 0
  %195 = vmatpush2.bf16.msra.mxu0 %v155
  %196 = vmatprep.subr.bf16.mxu0 0
  %197 = vmatpush2.bf16.msra.mxu0 %v154
  %198 = vmatprep.subr.bf16.mxu0 0
  %199 = vmatpush2.bf16.msra.mxu0 %v153
  %200 = vmatprep.subr.bf16.mxu0 0
  %201 = vmatpush2.bf16.msra.mxu0 %v152
  %202 = vmatprep.subr.bf16.mxu0 0
  %203 = vmatpush2.bf16.msra.mxu0 %v151
  %204 = vmatprep.subr.bf16.mxu0 0
  %205 = vmatpush2.bf16.msra.mxu0 %v150
  %206 = vmatprep.mubr.bf16.mxu0 %v71
  %207 = vmatmul.mubr.bf16.gmra.mxu0 %v70
  %v208 = vpop.f32.mrf.mxu0
  %v209 = vadd.f32 %v56, %v208
  %v210 = vpop.f32.mrf.mxu0
  %v211 = vpop.f32.mrf.mxu0
  %v212 = vadd.f32 %v56, %v211
  %v213 = vpop.f32.mrf.mxu0
  %214 = vmatprep.mubr.bf16.mxu0 %v73
  %215 = vmatmul.mubr.bf16.gmra.mxu0 %v72
  %v216 = vpop.f32.mrf.mxu0
  %v217 = vadd.f32 %v56, %v216
  %v218 = vpop.f32.mrf.mxu0
  %v219 = vpop.f32.mrf.mxu0
  %v220 = vadd.f32 %v56, %v219
  %v221 = vpop.f32.mrf.mxu0
  %222 = vdwg.mxu0
  %v223 = vmax.f32 %v209, 0.0
  %v224 = vmax.f32 %v212, 0.0
  %v225 = vmax.f32 %v217, 0.0
  %v226 = vmax.f32 %v220, 0.0
  %227 = vst [vmem:[%s3] sm:$0xff] %v223
  %228 = vst [vmem:[%s3 + $0x8] sm:$0xff] %v224
  %229 = vst [vmem:[%s3 + $0x10] sm:$0xff] %v225
  %230 = vst [vmem:[%s3 + $0x18] sm:$0xff] %v226
  // Predicated region
  $region14: #{image_inpainting_autoencoder_forward.10} parent=0 // pred_check
    _
  $region15: #{image_inpainting_autoencoder_forward.10} parent=0 // pred_check_branch
    %232 = sbr.rel (0) target = $region17
  $region16: #{image_inpainting_autoencoder_forward.10} parent=0 // pred_region
    _
  $region17: #{image_inpainting_autoencoder_forward.10} parent=0 // pred_fallthru
    _
  // Predicated region
  $region18: #{image_inpainting_autoencoder_forward.10} parent=0 // pred_check
    _
  $region19: #{image_inpainting_autoencoder_forward.10} parent=0 // pred_check_branch
    %234 = sbr.rel (0) target = $region21
  $region20: #{image_inpainting_autoencoder_forward.10} parent=0 // pred_region
    _
  $region21: #{image_inpainting_autoencoder_forward.10} parent=0 // pred_fallthru
    _

// kernel: image_inpainting_autoencoder_forward.11
$region0: #{image_inpainting_autoencoder_forward.11}
  #allocation0 [shape = 'u32[]', space=smem, size = 0x4, offset = 0x4, fixed_abs, tag = 'smem constant byte address 0x4 - core index']
  #allocation1 [shape = 'u32[144,128]{1,0:T(1,128)}', space=vmem, size = 0x12000, scoped, tag = 'internal scratch']
  %s0 = inlined_call_operand.vmem [shape: bf16[128,128], index: 0, kind: input, shape index: {}]
  %s1 = inlined_call_operand.vmem [shape: bf16[128,12], index: 1, kind: input, shape index: {}]
  %s2 = inlined_call_operand.vmem [shape: f32[1,12], index: 2, kind: input, shape index: {}]
  %s3 = inlined_call_operand.vmem [shape: f32[128,12], index: 3, kind: output, shape index: {}]
  %s4 = sld [smem:[#allocation0]]
  $region22: #{image_inpainting_autoencoder_forward.11} parent=0
    _
  %s6 = ssub.s32 1, %s4
  %s7 = scalar_select 0, %s6, %s4
  // Predicated region
  $region2: #{image_inpainting_autoencoder_forward.11} parent=0 // pred_check
    _
  $region3: #{image_inpainting_autoencoder_forward.11} parent=0 // pred_check_branch
    %9 = sbr.rel (0) target = $region5
  $region4: #{image_inpainting_autoencoder_forward.11} parent=0 // pred_region
    _
  $region5: #{image_inpainting_autoencoder_forward.11} parent=0 // pred_fallthru
    _
  // Predicated region
  $region6: #{image_inpainting_autoencoder_forward.11} parent=0 // pred_check
    _
  $region7: #{image_inpainting_autoencoder_forward.11} parent=0 // pred_check_branch
    %11 = sbr.rel (0) target = $region9
  $region8: #{image_inpainting_autoencoder_forward.11} parent=0 // pred_region
    _
  $region9: #{image_inpainting_autoencoder_forward.11} parent=0 // pred_fallthru
    _
  // Predicated region
  $region10: #{image_inpainting_autoencoder_forward.11} parent=0 // pred_check
    _
  $region11: #{image_inpainting_autoencoder_forward.11} parent=0 // pred_check_branch
    %13 = sbr.rel (0) target = $region13
  $region12: #{image_inpainting_autoencoder_forward.11} parent=0 // pred_region
    _
  $region13: #{image_inpainting_autoencoder_forward.11} parent=0 // pred_fallthru
    _
  %v15 = vld [vmem:[%s0] sm:$0xf]
  %v16 = vld [vmem:[%s0 + $0x4] sm:$0xf]
  %v17 = vld [vmem:[%s0 + $0x8] sm:$0xf]
  %v18 = vld [vmem:[%s0 + $0xc] sm:$0xf]
  %v19 = vld [vmem:[%s0 + $0x10] sm:$0xf]
  %v20 = vld [vmem:[%s0 + $0x14] sm:$0xf]
  %v21 = vld [vmem:[%s0 + $0x18] sm:$0xf]
  %v22 = vld [vmem:[%s0 + $0x1c] sm:$0xf]
  %v23 = vld [vmem:[%s0 + $0x20] sm:$0xf]
  %v24 = vld [vmem:[%s0 + $0x24] sm:$0xf]
  %v25 = vld [vmem:[%s0 + $0x28] sm:$0xf]
  %v26 = vld [vmem:[%s0 + $0x2c] sm:$0xf]
  %v27 = vld [vmem:[%s0 + $0x30] sm:$0xf]
  %v28 = vld [vmem:[%s0 + $0x34] sm:$0xf]
  %v29 = vld [vmem:[%s0 + $0x38] sm:$0xf]
  %v30 = vld [vmem:[%s0 + $0x3c] sm:$0xf]
  %v31 = vld [vmem:[%s1] sm:$0xf]
  %v32 = vld [vmem:[%s1 + $0x4] sm:$0xf]
  %v33 = vld [vmem:[%s1 + $0x8] sm:$0xf]
  %v34 = vld [vmem:[%s1 + $0xc] sm:$0xf]
  %v35 = vld [vmem:[%s1 + $0x10] sm:$0xf]
  %v36 = vld [vmem:[%s1 + $0x14] sm:$0xf]
  %v37 = vld [vmem:[%s1 + $0x18] sm:$0xf]
  %v38 = vld [vmem:[%s1 + $0x1c] sm:$0xf]
  %v39 = vld [vmem:[%s1 + $0x20] sm:$0xf]
  %v40 = vld [vmem:[%s1 + $0x24] sm:$0xf]
  %v41 = vld [vmem:[%s1 + $0x28] sm:$0xf]
  %v42 = vld [vmem:[%s1 + $0x2c] sm:$0xf]
  %v43 = vld [vmem:[%s1 + $0x30] sm:$0xf]
  %v44 = vld [vmem:[%s1 + $0x34] sm:$0xf]
  %v45 = vld [vmem:[%s1 + $0x38] sm:$0xf]
  %v46 = vld [vmem:[%s1 + $0x3c] sm:$0xf]
  %v47 = vld [vmem:[%s2] sm:$0x1]
  %v49 = vlaneseq
  %v50 = vshrl.u32 %v49, 7
  %v51 = vsub.s32 0, %v50
  %v52 = vrot.slane %v47, %v51
  %v70 = vunpack.c.l.b16 %v15
  %v71 = vunpack.c.l.b16 %v16
  %v72 = vunpack.c.l.b16 %v17
  %v73 = vunpack.c.l.b16 %v18
  %v74 = vunpack.c.l.b16 %v19
  %v75 = vunpack.c.l.b16 %v20
  %v76 = vunpack.c.l.b16 %v21
  %v77 = vunpack.c.l.b16 %v22
  %v78 = vunpack.c.l.b16 %v23
  %v79 = vunpack.c.l.b16 %v24
  %v80 = vunpack.c.l.b16 %v25
  %v81 = vunpack.c.l.b16 %v26
  %v82 = vunpack.c.l.b16 %v27
  %v83 = vunpack.c.l.b16 %v28
  %v84 = vunpack.c.l.b16 %v29
  %v85 = vunpack.c.l.b16 %v30
  %v86 = vpack.c.b16 %v71, %v70
  %v87 = vpack.c.b16 %v73, %v72
  %v88 = vpack.c.b16 %v75, %v74
  %v89 = vpack.c.b16 %v77, %v76
  %v90 = vpack.c.b16 %v79, %v78
  %v91 = vpack.c.b16 %v81, %v80
  %v92 = vpack.c.b16 %v83, %v82
  %v93 = vpack.c.b16 %v85, %v84
  %v118 = vunpack.c.l.b16 %v31
  %v119 = vunpack.c.l.b16 %v32
  %v120 = vunpack.c.l.b16 %v33
  %v121 = vunpack.c.l.b16 %v34
  %v122 = vunpack.c.l.b16 %v35
  %v123 = vunpack.c.l.b16 %v36
  %v124 = vunpack.c.l.b16 %v37
  %v125 = vunpack.c.l.b16 %v38
  %v126 = vunpack.c.l.b16 %v39
  %v127 = vunpack.c.l.b16 %v40
  %v128 = vunpack.c.l.b16 %v41
  %v129 = vunpack.c.l.b16 %v42
  %v130 = vunpack.c.l.b16 %v43
  %v131 = vunpack.c.l.b16 %v44
  %v132 = vunpack.c.l.b16 %v45
  %v133 = vunpack.c.l.b16 %v46
  %v134 = vpack.c.b16 %v119, %v118
  %v135 = vpack.c.b16 %v121, %v120
  %v136 = vpack.c.b16 %v123, %v122
  %v137 = vpack.c.b16 %v125, %v124
  %v138 = vpack.c.b16 %v127, %v126
  %v139 = vpack.c.b16 %v129, %v128
  %v140 = vpack.c.b16 %v131, %v130
  %v141 = vpack.c.b16 %v133, %v132
  %150 = vmatprep.subr.bf16.mxu0 0
  %151 = vmatpush1.bf16.msra.mxu0 %v141
  %152 = vmatprep.subr.bf16.mxu0 0
  %153 = vmatpush1.bf16.msra.mxu0 %v140
  %154 = vmatprep.subr.bf16.mxu0 0
  %155 = vmatpush1.bf16.msra.mxu0 %v139
  %156 = vmatprep.subr.bf16.mxu0 0
  %157 = vmatpush1.bf16.msra.mxu0 %v138
  %158 = vmatprep.subr.bf16.mxu0 0
  %159 = vmatpush1.bf16.msra.mxu0 %v137
  %160 = vmatprep.subr.bf16.mxu0 0
  %161 = vmatpush1.bf16.msra.mxu0 %v136
  %162 = vmatprep.subr.bf16.mxu0 0
  %163 = vmatpush1.bf16.msra.mxu0 %v135
  %164 = vmatprep.subr.bf16.mxu0 0
  %165 = vmatpush1.bf16.msra.mxu0 %v134
  %166 = vmatprep.subr.bf16.mxu0 0
  %167 = vmatpush2.bf16.msra.mxu0 0
  %168 = vmatprep.subr.bf16.mxu0 0
  %169 = vmatpush2.bf16.msra.mxu0 0
  %170 = vmatprep.subr.bf16.mxu0 0
  %171 = vmatpush2.bf16.msra.mxu0 0
  %172 = vmatprep.subr.bf16.mxu0 0
  %173 = vmatpush2.bf16.msra.mxu0 0
  %174 = vmatprep.subr.bf16.mxu0 0
  %175 = vmatpush2.bf16.msra.mxu0 0
  %176 = vmatprep.subr.bf16.mxu0 0
  %177 = vmatpush2.bf16.msra.mxu0 0
  %178 = vmatprep.subr.bf16.mxu0 0
  %179 = vmatpush2.bf16.msra.mxu0 0
  %180 = vmatprep.subr.bf16.mxu0 0
  %181 = vmatpush2.bf16.msra.mxu0 0
  %182 = vmatprep.mubr.bf16.mxu0 0
  %183 = vmatmul.mubr.bf16.gmra.mxu0 %v86
  %v184 = vpop.f32.mrf.mxu0
  %v185 = vadd.f32 %v52, %v184
  %v186 = vpop.f32.mrf.mxu0
  %v187 = vpop.f32.mrf.mxu0
  %v188 = vadd.f32 %v52, %v187
  %v189 = vpop.f32.mrf.mxu0
  %190 = vmatprep.mubr.bf16.mxu0 0
  %191 = vmatmul.mubr.bf16.gmra.mxu0 %v87
  %v192 = vpop.f32.mrf.mxu0
  %v193 = vadd.f32 %v52, %v192
  %v194 = vpop.f32.mrf.mxu0
  %v195 = vpop.f32.mrf.mxu0
  %v196 = vadd.f32 %v52, %v195
  %v197 = vpop.f32.mrf.mxu0
  %198 = vmatprep.mubr.bf16.mxu0 0
  %199 = vmatmul.mubr.bf16.gmra.mxu0 %v88
  %v200 = vpop.f32.mrf.mxu0
  %v201 = vadd.f32 %v52, %v200
  %v202 = vpop.f32.mrf.mxu0
  %v203 = vpop.f32.mrf.mxu0
  %v204 = vadd.f32 %v52, %v203
  %v205 = vpop.f32.mrf.mxu0
  %206 = vmatprep.mubr.bf16.mxu0 0
  %207 = vmatmul.mubr.bf16.gmra.mxu0 %v89
  %v208 = vpop.f32.mrf.mxu0
  %v209 = vadd.f32 %v52, %v208
  %v210 = vpop.f32.mrf.mxu0
  %v211 = vpop.f32.mrf.mxu0
  %v212 = vadd.f32 %v52, %v211
  %v213 = vpop.f32.mrf.mxu0
  %214 = vmatprep.mubr.bf16.mxu0 0
  %215 = vmatmul.mubr.bf16.gmra.mxu0 %v90
  %v216 = vpop.f32.mrf.mxu0
  %v217 = vadd.f32 %v52, %v216
  %v218 = vpop.f32.mrf.mxu0
  %v219 = vpop.f32.mrf.mxu0
  %v220 = vadd.f32 %v52, %v219
  %v221 = vpop.f32.mrf.mxu0
  %222 = vmatprep.mubr.bf16.mxu0 0
  %223 = vmatmul.mubr.bf16.gmra.mxu0 %v91
  %v224 = vpop.f32.mrf.mxu0
  %v225 = vadd.f32 %v52, %v224
  %v226 = vpop.f32.mrf.mxu0
  %v227 = vpop.f32.mrf.mxu0
  %v228 = vadd.f32 %v52, %v227
  %v229 = vpop.f32.mrf.mxu0
  %230 = vmatprep.mubr.bf16.mxu0 0
  %231 = vmatmul.mubr.bf16.gmra.mxu0 %v92
  %v232 = vpop.f32.mrf.mxu0
  %v233 = vadd.f32 %v52, %v232
  %v234 = vpop.f32.mrf.mxu0
  %v235 = vpop.f32.mrf.mxu0
  %v236 = vadd.f32 %v52, %v235
  %v237 = vpop.f32.mrf.mxu0
  %238 = vmatprep.mubr.bf16.mxu0 0
  %239 = vmatmul.mubr.bf16.gmra.mxu0 %v93
  %v240 = vpop.f32.mrf.mxu0
  %v241 = vadd.f32 %v52, %v240
  %v242 = vpop.f32.mrf.mxu0
  %v243 = vpop.f32.mrf.mxu0
  %v244 = vadd.f32 %v52, %v243
  %v245 = vpop.f32.mrf.mxu0
  %246 = vdwg.mxu0
  %v247 = vtanh.pop %v185
  %v248 = vtanh.pop %v188
  %v249 = vtanh.pop %v193
  %v250 = vtanh.pop %v196
  %v251 = vtanh.pop %v201
  %v252 = vtanh.pop %v204
  %v253 = vtanh.pop %v209
  %v254 = vtanh.pop %v212
  %v255 = vtanh.pop %v217
  %v256 = vtanh.pop %v220
  %v257 = vtanh.pop %v225
  %v258 = vtanh.pop %v228
  %v259 = vtanh.pop %v233
  %v260 = vtanh.pop %v236
  %v261 = vtanh.pop %v241
  %v262 = vtanh.pop %v244
  %vm263 = vcmask 97280
  %264 = vst.msk [vmem:[%s3] sm:$0xff] %vm263, %v247
  %265 = vst.msk [vmem:[%s3 + $0x8] sm:$0xff] %vm263, %v248
  %266 = vst.msk [vmem:[%s3 + $0x10] sm:$0xff] %vm263, %v249
  %267 = vst.msk [vmem:[%s3 + $0x18] sm:$0xff] %vm263, %v250
  %268 = vst.msk [vmem:[%s3 + $0x20] sm:$0xff] %vm263, %v251
  %269 = vst.msk [vmem:[%s3 + $0x28] sm:$0xff] %vm263, %v252
  %270 = vst.msk [vmem:[%s3 + $0x30] sm:$0xff] %vm263, %v253
  %271 = vst.msk [vmem:[%s3 + $0x38] sm:$0xff] %vm263, %v254
  %272 = vst.msk [vmem:[%s3 + $0x40] sm:$0xff] %vm263, %v255
  %273 = vst.msk [vmem:[%s3 + $0x48] sm:$0xff] %vm263, %v256
  %274 = vst.msk [vmem:[%s3 + $0x50] sm:$0xff] %vm263, %v257
  %275 = vst.msk [vmem:[%s3 + $0x58] sm:$0xff] %vm263, %v258
  %276 = vst.msk [vmem:[%s3 + $0x60] sm:$0xff] %vm263, %v259
  %277 = vst.msk [vmem:[%s3 + $0x68] sm:$0xff] %vm263, %v260
  %278 = vst.msk [vmem:[%s3 + $0x70] sm:$0xff] %vm263, %v261
  %279 = vst.msk [vmem:[%s3 + $0x78] sm:$0xff] %vm263, %v262
  // Predicated region
  $region14: #{image_inpainting_autoencoder_forward.11} parent=0 // pred_check
    _
  $region15: #{image_inpainting_autoencoder_forward.11} parent=0 // pred_check_branch
    %281 = sbr.rel (0) target = $region17
  $region16: #{image_inpainting_autoencoder_forward.11} parent=0 // pred_region
    _
  $region17: #{image_inpainting_autoencoder_forward.11} parent=0 // pred_fallthru
    _
  // Predicated region
  $region18: #{image_inpainting_autoencoder_forward.11} parent=0 // pred_check
    _
  $region19: #{image_inpainting_autoencoder_forward.11} parent=0 // pred_check_branch
    %283 = sbr.rel (0) target = $region21
  $region20: #{image_inpainting_autoencoder_forward.11} parent=0 // pred_region
    _
  $region21: #{image_inpainting_autoencoder_forward.11} parent=0 // pred_fallthru
    _

</llo_original>
